<compile_context>
chip_gen: v5e
topology: v5e:2x2
jax: 0.10.0
libtpu: 0.0.40
codegen_flags: <defaults>
</compile_context>

<pallas_src>
import jax
import jax.numpy as jnp
from jax import lax
from jax.experimental import pallas as pl
from jax.experimental.pallas import tpu as pltpu

# ---- loss hyper-parameters (from the module's __init__) --------------------
POS_WEIGHT    = 10.0   # BCEWithLogitsLoss(pos_weight=10.0)
IOU_SMOOTH    = 1.0    # IoULoss default smooth
VAR_WEIGHT    = 1.0    # NDPushPullLoss(1.0, 1.0, 1.0, 5.0, 200)
DIST_WEIGHT   = 1.0
MARGIN_VAR    = 1.0
MARGIN_DIST   = 5.0
IGNORE_LABEL  = 200
MAX_INSTANCES = 5      # static cap on instance ids in gt (< IGNORE_LABEL)
N_EMB         = 2      # embedding channels of the synthetic model head
COUT          = 4 + 2 * N_EMB   # pred, emb, offset_y, z, pred_2d, emb_2d
N_GT          = 6      # gt_seg, gt_instance, gt_offset_y, gt_z, img_seg, img_inst
PART_LANES    = 128    # lane-dense per-batch partial-sum row
_FAR          = 1e4    # sentinel offset for absent instance centers
VMEM_LIMIT_BYTES = 64 * 1024 * 1024   # fits all generations; re-derive for v7x tiling

# partial-sum lane indices
(_I_BCE, _I_INTER, _I_TOTAL, _I_BCEOFF, _I_MSE, _I_EMB,
 _I_BCE2D, _I_INTER2D, _I_TOTAL2D, _I_EMB2D) = range(10)
_N_PART = 10


# ------------------------------ kernel helpers ------------------------------
def _sigmoid_softplus(x):
    """sigmoid(x), softplus(-x), softplus(x) sharing a single exp.

    Called ONCE on the full (COUT, P) block so the EUP/VPU work is
    8-sublane dense (review item 1).  Exact divide (no approx reciprocal).
    """
    e = jnp.exp(-jnp.abs(x))
    lg = jnp.log(1.0 + e)
    sp_neg = jnp.maximum(-x, 0.0) + lg        # softplus(-x) = -log sigmoid(x)
    sp_pos = jnp.maximum(x, 0.0) + lg         # softplus(x)  = -log(1 - sigmoid(x))
    inv = 1.0 / (1.0 + e)
    sig = jnp.where(x >= 0.0, inv, e * inv)
    return sig, sp_neg, sp_pos


def _seg_sums(sig_row, sp_neg_row, sp_pos_row, target):
    """BCEWithLogits(pos_weight) + IoU partial sums from precomputed rows."""
    bce = jnp.sum(POS_WEIGHT * target * sp_neg_row + (1.0 - target) * sp_pos_row)
    inter = jnp.sum(sig_row * target)
    total = jnp.sum(sig_row + target)
    return bce, inter, total


def _pushpull_loss_one_batch(feat, inst):
    """NDPushPullLoss numerator for one sample (host divides by B).

    feat: (N_EMB, P) f32 embedding, inst: (1, P) f32 instance-id map.
    """
    m = MAX_INSTANCES
    p = feat.shape[1]
    ids = (lax.broadcasted_iota(jnp.int32, (m, p), 0) + 1).astype(jnp.float32)
    masks = (inst == ids).astype(jnp.float32)                     # (M, P)
    counts = jnp.sum(masks, axis=1, keepdims=True)                # (M, 1)
    safe = jnp.maximum(counts, 1.0)
    absent = (counts <= 0.0).astype(jnp.float32)                  # (M, 1)

    # instance centers: (M,P) x (N,P)^T -> (M,N) on the MXU
    centers = lax.dot_general(masks, feat, (((1,), (1,)), ((), ())),
                              preferred_element_type=jnp.float32) / safe

    # pull: per-pixel distance to own center via |f|^2 - 2 c.f + |c|^2
    feat_n2 = jnp.sum(feat * feat, axis=0, keepdims=True)         # (1, P)
    cen_n2 = jnp.sum(centers * centers, axis=1, keepdims=True)    # (M, 1)
    cross = jnp.dot(centers, feat, preferred_element_type=jnp.float32)  # (M, P)
    dist = jnp.sqrt(jnp.maximum(feat_n2 - 2.0 * cross + cen_n2, 0.0))
    pull_i = jnp.sum(jnp.maximum(dist - MARGIN_VAR, 0.0) * masks,
                     axis=1, keepdims=True) / safe                # (M, 1)
    pull = jnp.sum(pull_i)              # absent instances contribute exactly 0

    # push: pairwise distances between present centers.  Absent centers are
    # moved to distinct far-away points so relu(MARGIN_DIST - d) removes every
    # pair that touches them (equivalent to the presence check).
    inst_idx = (lax.broadcasted_iota(jnp.int32, (m, 1), 0) + 1).astype(jnp.float32)
    cg = centers + absent * _FAR * inst_idx                       # (M, N)
    cc = lax.dot_general(cg, cg, (((1,), (1,)), ((), ())),
                         preferred_element_type=jnp.float32)      # (M, M)
    row = lax.broadcasted_iota(jnp.int32, (m, m), 0)
    col = lax.broadcasted_iota(jnp.int32, (m, m), 1)
    eye = (row == col).astype(jnp.float32)
    n2_col = jnp.sum(cc * eye, axis=1, keepdims=True)             # (M, 1) = |c_i|^2
    n2_row = jnp.sum(cc * eye, axis=0, keepdims=True)             # (1, M) = |c_j|^2
    cd = jnp.sqrt(jnp.maximum(n2_col + n2_row - 2.0 * cc, 0.0))
    push = jnp.sum((1.0 - eye) * jnp.maximum(MARGIN_DIST - cd, 0.0))

    # TODO(synk): reference NDPushPullLoss source not given; keeps the
    # sum-over-instances / ordered-pairs, divide-by-B normalization, and ids
    # are statically capped at MAX_INSTANCES (torch iterates all ids < 200).
    return VAR_WEIGHT * pull + DIST_WEIGHT * push


# ------------------------------ fused kernel --------------------------------
def _fused_kernel(x_ref, w_ref, bias_ref, gt_ref, pred_ref, part_ref):
    x = x_ref[0]                                                  # (Cin, P)
    y = (jnp.dot(w_ref[...], x, preferred_element_type=jnp.float32)
         + bias_ref[...])                                         # (Cout, P)

    # one dense transcendental pass over all head channels (review item 1)
    sig, sp_neg, sp_pos = _sigmoid_softplus(y)                    # (Cout, P) each

    pred_ref[0] = y[0:1, :]                                       # logits out

    g = gt_ref[0]                                                 # (N_GT, P)
    gt_seg   = g[0:1, :]
    gt_inst  = g[1:2, :]
    gt_off   = g[2:3, :]
    gt_z     = g[3:4, :]
    img_seg  = g[4:5, :]
    img_inst = g[5:6, :]

    # segmentation heads: BCEWithLogits(pos_weight) + IoU partial sums
    bce_seg, inter_bev, total_bev = _seg_sums(sig[0:1], sp_neg[0:1], sp_pos[0:1],
                                              gt_seg)
    bce_2d, inter_2d, total_2d = _seg_sums(sig[5:6], sp_neg[5:6], sp_pos[5:6],
                                           img_seg)

    # offset BCE on gt_seg * sigmoid(offset_y), in logit space (review item 2):
    #   gt_seg==1 : log p = -softplus(-o), log(1-p) = -softplus(o)
    #   gt_seg==0 : log p = -100 (torch BCELoss clamp), log(1-p) = 0
    # TODO(synk): assumes binary gt_seg (as in BEV-LaneDet masks).
    lp   = jnp.maximum(-sp_neg[3:4], -100.0)
    l1mp = jnp.maximum(-sp_pos[3:4], -100.0)
    log_p   = jnp.where(gt_seg > 0.5, lp, -100.0)
    log_1mp = jnp.where(gt_seg > 0.5, l1mp, 0.0)
    bce_off = -jnp.sum(gt_off * log_p + (1.0 - gt_off) * log_1mp)

    # z MSE (sum only; mean taken on host)
    dz = gt_seg * y[4:5, :] - gt_z
    mse_z = jnp.sum(dz * dz)

    # embedding push/pull losses for both heads (MXU-based)
    emb_loss = _pushpull_loss_one_batch(y[1:1 + N_EMB, :], gt_inst)
    emb_loss_2d = _pushpull_loss_one_batch(y[4 + N_EMB:4 + 2 * N_EMB, :], img_inst)

    # lane-dense partial-sum row: independent one-hot products + balanced add
    # tree (no 10-deep serial dependent chain).
    vals = (bce_seg, inter_bev, total_bev, bce_off, mse_z, emb_loss,
            bce_2d, inter_2d, total_2d, emb_loss_2d)
    lane = lax.broadcasted_iota(jnp.int32, (1, 1, PART_LANES), 2)
    terms = [(lane == k).astype(jnp.float32) * v for k, v in enumerate(vals)]
    while len(terms) > 1:
        nxt = []
        for i in range(0, len(terms), 2):
            if i + 1 < len(terms):
                nxt.append(terms[i] + terms[i + 1])
            else:
                nxt.append(terms[i])
        terms = nxt
    part_ref[...] = terms[0]


def _fused_forward(params, x3, gt_pack):
    B, cin, P = x3.shape
    cout = params["w"].shape[0]
    map_b = lambda b: (b, 0, 0)
    map_full = lambda b: (0, 0)
    # NOTE: if profiling shows the (small) gt DMA exposed, raise only its
    # pipeline depth via pipeline_mode=pl.Buffered(3); keep depth 2 on x.
    return pl.pallas_call(
        _fused_kernel,
        out_shape=(jax.ShapeDtypeStruct((B, 1, P), jnp.float32),
                   jax.ShapeDtypeStruct((B, 1, PART_LANES), jnp.float32)),
        grid=(B,),
        in_specs=[pl.BlockSpec((1, cin, P), map_b),
                  pl.BlockSpec((cout, cin), map_full),
                  pl.BlockSpec((cout, 1), map_full),
                  pl.BlockSpec((1, N_GT, P), map_b)],      # single packed gt DMA
        out_specs=(pl.BlockSpec((1, 1, P), map_b),
                   pl.BlockSpec((1, 1, PART_LANES), map_b)),
        compiler_params=pltpu.CompilerParams(
            dimension_semantics=("parallel",),
            vmem_limit_bytes=VMEM_LIMIT_BYTES),
    )(x3, params["w"], params["b"], gt_pack)


# ------------------------- inference-only (train=False) ---------------------
def _pred_only_kernel(x_ref, w_ref, bias_ref, pred_ref):
    x = x_ref[0]
    y = (jnp.dot(w_ref[...], x, preferred_element_type=jnp.float32)
         + bias_ref[...])
    pred_ref[0] = y[0:1, :]


def _pred_only_forward(params, x3):
    B, cin, P = x3.shape
    cout = params["w"].shape[0]
    return pl.pallas_call(
        _pred_only_kernel,
        out_shape=jax.ShapeDtypeStruct((B, 1, P), jnp.float32),
        grid=(B,),
        in_specs=[pl.BlockSpec((1, cin, P), lambda b: (b, 0, 0)),
                  pl.BlockSpec((cout, cin), lambda b: (0, 0)),
                  pl.BlockSpec((cout, 1), lambda b: (0, 0))],
        out_specs=pl.BlockSpec((1, 1, P), lambda b: (b, 0, 0)),
        compiler_params=pltpu.CompilerParams(
            dimension_semantics=("parallel",),
            vmem_limit_bytes=VMEM_LIMIT_BYTES),
    )(x3, params["w"], params["b"])


# ------------------------------ model + forward -----------------------------
def init_model_params(key, cin):
    kw, kb = jax.random.split(key)
    w = 0.5 * jax.random.normal(kw, (COUT, cin), jnp.float32)
    b = 0.1 * jax.random.normal(kb, (COUT, 1), jnp.float32)
    return {"w": w, "b": b}


def combine_forward(params, inputs, gt_seg=None, gt_instance=None, gt_offset_y=None,
                    gt_z=None, image_gt_segment=None, image_gt_instance=None,
                    train=True):
    # TODO(synk): forward-only; training through this kernel needs a custom_vjp.
    # NOTE: on v5e, casting x/w to bfloat16 (keeping preferred_element_type=f32)
    # halves the dominant HBM stream; kept f32 here for exact parity.
    B, cin, H, W = inputs.shape
    P = H * W
    # NCHW -> (B, C, H*W) is a pure reshape (no transpose / extra HBM pass).
    x3 = inputs.reshape(B, cin, P).astype(jnp.float32)

    if not train:
        return _pred_only_forward(params, x3).reshape(B, 1, H, W)

    # pack the six gt maps into ONE (B, 6, P) stream: single DMA per grid step.
    gt_pack = jnp.concatenate(
        [g.reshape(B, 1, P).astype(jnp.float32)
         for g in (gt_seg, gt_instance, gt_offset_y, gt_z,
                   image_gt_segment, image_gt_instance)], axis=1)

    pred3, parts = _fused_forward(params, x3, gt_pack)
    pred = pred3.reshape(B, 1, H, W)

    p = parts[:, 0, :]                       # (B, PART_LANES) per-batch partials
    n_px = float(B * P)                      # mean denominator (channel dim = 1)

    def iou_from(inter, total):
        union = total - inter
        return 1.0 - (inter + IOU_SMOOTH) / (union + IOU_SMOOTH)

    loss_seg = (jnp.sum(p[:, _I_BCE]) / n_px
                + iou_from(jnp.sum(p[:, _I_INTER]), jnp.sum(p[:, _I_TOTAL])))
    loss_emb = jnp.sum(p[:, _I_EMB]) / B
    loss_offset_val = jnp.sum(p[:, _I_BCEOFF]) / n_px
    loss_z_val = jnp.sum(p[:, _I_MSE]) / n_px
    loss_seg_2d = (jnp.sum(p[:, _I_BCE2D]) / n_px
                   + iou_from(jnp.sum(p[:, _I_INTER2D]), jnp.sum(p[:, _I_TOTAL2D])))
    loss_emb_2d = jnp.sum(p[:, _I_EMB2D]) / B

    loss_total = jnp.reshape(3.0 * loss_seg + 0.5 * loss_emb, (1,))
    loss_total_2d = jnp.reshape(3.0 * loss_seg_2d + 0.5 * loss_emb_2d, (1,))
    loss_offset = jnp.reshape(60.0 * loss_offset_val, (1,))
    loss_z = jnp.reshape(30.0 * loss_z_val, (1,))
    return pred, loss_total, loss_total_2d, loss_offset, loss_z


if __name__ == "__main__":
    B, Cin, H, W = 2, 4, 16, 16
    key = jax.random.PRNGKey(0)
    k = jax.random.split(key, 8)
    params = init_model_params(k[0], Cin)
    x = jax.random.normal(k[1], (B, Cin, H, W), jnp.float32)
    gt_seg = (jax.random.uniform(k[2], (B, 1, H, W)) > 0.7).astype(jnp.float32)
    gt_instance = jax.random.randint(k[3], (B, 1, H, W), 0, MAX_INSTANCES + 1).astype(jnp.float32)
    gt_offset_y = jax.random.uniform(k[4], (B, 1, H, W), dtype=jnp.float32)
    gt_z = jax.random.normal(k[5], (B, 1, H, W), jnp.float32)
    image_gt_segment = (jax.random.uniform(k[6], (B, 1, H, W)) > 0.7).astype(jnp.float32)
    image_gt_instance = jax.random.randint(k[7], (B, 1, H, W), 0, MAX_INSTANCES + 1).astype(jnp.float32)

    fwd = jax.jit(combine_forward)
    outs = fwd(params, x, gt_seg, gt_instance, gt_offset_y, gt_z,
               image_gt_segment, image_gt_instance)
    outs = jax.block_until_ready(outs)
    assert outs[0].shape == (B, 1, H, W)
    assert all(o.shape == (1,) for o in outs[1:])
    assert all(bool(jnp.all(jnp.isfinite(o))) for o in outs)

    # inference path
    pred_only = jax.jit(lambda p, xx: combine_forward(p, xx, train=False))(params, x)
    pred_only = jax.block_until_ready(pred_only)
    assert pred_only.shape == (B, 1, H, W)

    print("KERNEL_OK")
</pallas_src>

<mosaic_0001>
module attributes {stable_mosaic.version = 11 : i64} {
  func.func @_fused_kernel(%arg0: i32, %arg1: memref<1x4x256xf32, #tpu.memory_space<vmem>>, %arg2: memref<8x4xf32, #tpu.memory_space<vmem>>, %arg3: memref<8x1xf32, #tpu.memory_space<vmem>>, %arg4: memref<1x6x256xf32, #tpu.memory_space<vmem>>, %arg5: memref<1x1x256xf32, #tpu.memory_space<vmem>>, %arg6: memref<1x1x128xf32, #tpu.memory_space<vmem>>) attributes {dimension_semantics = [#tpu.dimension_semantics<parallel>], iteration_bounds = array<i64: 2>, scalar_prefetch = 0 : i64, scratch_operands = 0 : i64, tpu.core_type = #tpu.core_type<tc>, window_params = [{transform_indices = @transform_0, window_bounds = array<i64: 1, 4, 256>}, {pipeline_mode = #tpu.pipeline_mode<synchronous>, transform_indices = @transform_1, window_bounds = array<i64: 8, 4>}, {pipeline_mode = #tpu.pipeline_mode<synchronous>, transform_indices = @transform_2, window_bounds = array<i64: 8, 1>}, {transform_indices = @transform_3, window_bounds = array<i64: 1, 6, 256>}, {transform_indices = @transform_4, window_bounds = array<i64: 1, 1, 256>}, {transform_indices = @transform_5, window_bounds = array<i64: 1, 1, 128>}]} {
    %c0 = arith.constant 0 : index
    %c0_0 = arith.constant 0 : index
    %c0_1 = arith.constant 0 : index
    %0 = vector.load %arg1[%c0, %c0_0, %c0_1] : memref<1x4x256xf32, #tpu.memory_space<vmem>>, vector<1x4x256xf32>
    %1 = vector.shape_cast %0 : vector<1x4x256xf32> to vector<4x256xf32>
    %c0_2 = arith.constant 0 : index
    %c0_3 = arith.constant 0 : index
    %2 = vector.load %arg2[%c0_2, %c0_3] : memref<8x4xf32, #tpu.memory_space<vmem>>, vector<8x4xf32>
    %cst = arith.constant dense<0.000000e+00> : vector<8x256xf32>
    %3 = tpu.matmul %2, %1, %cst {dimension_numbers = #tpu.dot_dimension_numbers<[1], [0], [0], [1], [0, 0, 1, 1], [], []>} : vector<8x4xf32>, vector<4x256xf32>, vector<8x256xf32> -> vector<8x256xf32>
    %c0_4 = arith.constant 0 : index
    %c0_5 = arith.constant 0 : index
    %4 = vector.load %arg3[%c0_4, %c0_5] : memref<8x1xf32, #tpu.memory_space<vmem>>, vector<8x1xf32>
    %5 = vector.broadcast %4 : vector<8x1xf32> to vector<8x256xf32>
    %6 = arith.addf %3, %5 : vector<8x256xf32>
    %7 = math.absf %6 : vector<8x256xf32>
    %cst_6 = arith.constant 0.000000e+00 : f32
    %8 = vector.broadcast %cst_6 : f32 to vector<8x256xf32>
    %9 = arith.subf %8, %7 : vector<8x256xf32>
    %10 = math.exp %9 : vector<8x256xf32>
    %cst_7 = arith.constant 1.000000e+00 : f32
    %11 = vector.broadcast %cst_7 : f32 to vector<8x256xf32>
    %12 = arith.addf %11, %10 : vector<8x256xf32>
    %13 = math.log %12 : vector<8x256xf32>
    %cst_8 = arith.constant 0.000000e+00 : f32
    %14 = vector.broadcast %cst_8 : f32 to vector<8x256xf32>
    %15 = arith.subf %14, %6 : vector<8x256xf32>
    %cst_9 = arith.constant 0.000000e+00 : f32
    %16 = vector.broadcast %cst_9 : f32 to vector<8x256xf32>
    %17 = arith.maximumf %15, %16 : vector<8x256xf32>
    %18 = arith.addf %17, %13 : vector<8x256xf32>
    %cst_10 = arith.constant 0.000000e+00 : f32
    %19 = vector.broadcast %cst_10 : f32 to vector<8x256xf32>
    %20 = arith.maximumf %6, %19 : vector<8x256xf32>
    %21 = arith.addf %20, %13 : vector<8x256xf32>
    %cst_11 = arith.constant 1.000000e+00 : f32
    %22 = vector.broadcast %cst_11 : f32 to vector<8x256xf32>
    %23 = arith.addf %22, %10 : vector<8x256xf32>
    %cst_12 = arith.constant 1.000000e+00 : f32
    %24 = vector.broadcast %cst_12 : f32 to vector<8x256xf32>
    %25 = arith.divf %24, %23 : vector<8x256xf32>
    %cst_13 = arith.constant 0.000000e+00 : f32
    %26 = vector.broadcast %cst_13 : f32 to vector<8x256xf32>
    %27 = arith.cmpf oge, %6, %26 : vector<8x256xf32>
    %28 = arith.mulf %10, %25 : vector<8x256xf32>
    %29 = arith.select %27, %25, %28 : vector<8x256xi1>, vector<8x256xf32>
    %30 = vector.extract_strided_slice %6 {offsets = [0, 0], sizes = [1, 256], strides = [1, 1]} : vector<8x256xf32> to vector<1x256xf32>
    %c0_14 = arith.constant 0 : index
    %c0_15 = arith.constant 0 : index
    %c0_16 = arith.constant 0 : index
    %31 = vector.load %arg5[%c0_14, %c0_15, %c0_16] : memref<1x1x256xf32, #tpu.memory_space<vmem>>, vector<1x1x256xf32>
    %32 = vector.shape_cast %31 : vector<1x1x256xf32> to vector<1x256xf32>
    %33 = vector.shape_cast %30 : vector<1x256xf32> to vector<1x1x256xf32>
    tpu.vector_store %arg5[%c0_14, %c0_15, %c0_16], %33 {strides = array<i32>} : memref<1x1x256xf32, #tpu.memory_space<vmem>>, vector<1x1x256xf32>,
    %c0_17 = arith.constant 0 : index
    %c0_18 = arith.constant 0 : index
    %c0_19 = arith.constant 0 : index
    %34 = vector.load %arg4[%c0_17, %c0_18, %c0_19] : memref<1x6x256xf32, #tpu.memory_space<vmem>>, vector<1x6x256xf32>
    %35 = vector.shape_cast %34 : vector<1x6x256xf32> to vector<6x256xf32>
    %36 = vector.extract_strided_slice %35 {offsets = [0, 0], sizes = [1, 256], strides = [1, 1]} : vector<6x256xf32> to vector<1x256xf32>
    %37 = vector.extract_strided_slice %35 {offsets = [1, 0], sizes = [1, 256], strides = [1, 1]} : vector<6x256xf32> to vector<1x256xf32>
    %38 = vector.extract_strided_slice %35 {offsets = [2, 0], sizes = [1, 256], strides = [1, 1]} : vector<6x256xf32> to vector<1x256xf32>
    %39 = vector.extract_strided_slice %35 {offsets = [3, 0], sizes = [1, 256], strides = [1, 1]} : vector<6x256xf32> to vector<1x256xf32>
    %40 = vector.extract_strided_slice %35 {offsets = [4, 0], sizes = [1, 256], strides = [1, 1]} : vector<6x256xf32> to vector<1x256xf32>
    %41 = vector.extract_strided_slice %35 {offsets = [5, 0], sizes = [1, 256], strides = [1, 1]} : vector<6x256xf32> to vector<1x256xf32>
    %42 = vector.extract_strided_slice %29 {offsets = [0, 0], sizes = [1, 256], strides = [1, 1]} : vector<8x256xf32> to vector<1x256xf32>
    %43 = vector.extract_strided_slice %18 {offsets = [0, 0], sizes = [1, 256], strides = [1, 1]} : vector<8x256xf32> to vector<1x256xf32>
    %44 = vector.extract_strided_slice %21 {offsets = [0, 0], sizes = [1, 256], strides = [1, 1]} : vector<8x256xf32> to vector<1x256xf32>
    %cst_20 = arith.constant 1.000000e+01 : f32
    %45 = vector.broadcast %cst_20 : f32 to vector<1x256xf32>
    %46 = arith.mulf %45, %36 : vector<1x256xf32>
    %47 = arith.mulf %46, %43 : vector<1x256xf32>
    %cst_21 = arith.constant 1.000000e+00 : f32
    %48 = vector.broadcast %cst_21 : f32 to vector<1x256xf32>
    %49 = arith.subf %48, %36 : vector<1x256xf32>
    %50 = arith.mulf %49, %44 : vector<1x256xf32>
    %51 = arith.addf %47, %50 : vector<1x256xf32>
    %52 = vector.shape_cast %51 : vector<1x256xf32> to vector<1x1x256xf32>
    %cst_22 = arith.constant dense<0.000000e+00> : vector<1xf32>
    %53 = vector.multi_reduction <add>, %52, %cst_22 [1, 2] : vector<1x1x256xf32> to vector<1xf32>
    %54 = vector.shape_cast %53 : vector<1xf32> to vector<1x1x1xf32>
    %55 = vector.extract %54[0, 0, 0] : f32 from vector<1x1x1xf32>
    %56 = arith.mulf %42, %36 : vector<1x256xf32>
    %57 = vector.shape_cast %56 : vector<1x256xf32> to vector<1x1x256xf32>
    %cst_23 = arith.constant dense<0.000000e+00> : vector<1xf32>
    %58 = vector.multi_reduction <add>, %57, %cst_23 [1, 2] : vector<1x1x256xf32> to vector<1xf32>
    %59 = vector.shape_cast %58 : vector<1xf32> to vector<1x1x1xf32>
    %60 = vector.extract %59[0, 0, 0] : f32 from vector<1x1x1xf32>
    %61 = arith.addf %42, %36 : vector<1x256xf32>
    %62 = vector.shape_cast %61 : vector<1x256xf32> to vector<1x1x256xf32>
    %cst_24 = arith.constant dense<0.000000e+00> : vector<1xf32>
    %63 = vector.multi_reduction <add>, %62, %cst_24 [1, 2] : vector<1x1x256xf32> to vector<1xf32>
    %64 = vector.shape_cast %63 : vector<1xf32> to vector<1x1x1xf32>
    %65 = vector.extract %64[0, 0, 0] : f32 from vector<1x1x1xf32>
    %66 = vector.extract_strided_slice %29 {offsets = [5, 0], sizes = [1, 256], strides = [1, 1]} : vector<8x256xf32> to vector<1x256xf32>
    %67 = vector.extract_strided_slice %18 {offsets = [5, 0], sizes = [1, 256], strides = [1, 1]} : vector<8x256xf32> to vector<1x256xf32>
    %68 = vector.extract_strided_slice %21 {offsets = [5, 0], sizes = [1, 256], strides = [1, 1]} : vector<8x256xf32> to vector<1x256xf32>
    %cst_25 = arith.constant 1.000000e+01 : f32
    %69 = vector.broadcast %cst_25 : f32 to vector<1x256xf32>
    %70 = arith.mulf %69, %40 : vector<1x256xf32>
    %71 = arith.mulf %70, %67 : vector<1x256xf32>
    %cst_26 = arith.constant 1.000000e+00 : f32
    %72 = vector.broadcast %cst_26 : f32 to vector<1x256xf32>
    %73 = arith.subf %72, %40 : vector<1x256xf32>
    %74 = arith.mulf %73, %68 : vector<1x256xf32>
    %75 = arith.addf %71, %74 : vector<1x256xf32>
    %76 = vector.shape_cast %75 : vector<1x256xf32> to vector<1x1x256xf32>
    %cst_27 = arith.constant dense<0.000000e+00> : vector<1xf32>
    %77 = vector.multi_reduction <add>, %76, %cst_27 [1, 2] : vector<1x1x256xf32> to vector<1xf32>
    %78 = vector.shape_cast %77 : vector<1xf32> to vector<1x1x1xf32>
    %79 = vector.extract %78[0, 0, 0] : f32 from vector<1x1x1xf32>
    %80 = arith.mulf %66, %40 : vector<1x256xf32>
    %81 = vector.shape_cast %80 : vector<1x256xf32> to vector<1x1x256xf32>
    %cst_28 = arith.constant dense<0.000000e+00> : vector<1xf32>
    %82 = vector.multi_reduction <add>, %81, %cst_28 [1, 2] : vector<1x1x256xf32> to vector<1xf32>
    %83 = vector.shape_cast %82 : vector<1xf32> to vector<1x1x1xf32>
    %84 = vector.extract %83[0, 0, 0] : f32 from vector<1x1x1xf32>
    %85 = arith.addf %66, %40 : vector<1x256xf32>
    %86 = vector.shape_cast %85 : vector<1x256xf32> to vector<1x1x256xf32>
    %cst_29 = arith.constant dense<0.000000e+00> : vector<1xf32>
    %87 = vector.multi_reduction <add>, %86, %cst_29 [1, 2] : vector<1x1x256xf32> to vector<1xf32>
    %88 = vector.shape_cast %87 : vector<1xf32> to vector<1x1x1xf32>
    %89 = vector.extract %88[0, 0, 0] : f32 from vector<1x1x1xf32>
    %90 = vector.extract_strided_slice %18 {offsets = [3, 0], sizes = [1, 256], strides = [1, 1]} : vector<8x256xf32> to vector<1x256xf32>
    %cst_30 = arith.constant 0.000000e+00 : f32
    %91 = vector.broadcast %cst_30 : f32 to vector<1x256xf32>
    %92 = arith.subf %91, %90 : vector<1x256xf32>
    %cst_31 = arith.constant -1.000000e+02 : f32
    %93 = vector.broadcast %cst_31 : f32 to vector<1x256xf32>
    %94 = arith.maximumf %92, %93 : vector<1x256xf32>
    %95 = vector.extract_strided_slice %21 {offsets = [3, 0], sizes = [1, 256], strides = [1, 1]} : vector<8x256xf32> to vector<1x256xf32>
    %cst_32 = arith.constant 0.000000e+00 : f32
    %96 = vector.broadcast %cst_32 : f32 to vector<1x256xf32>
    %97 = arith.subf %96, %95 : vector<1x256xf32>
    %cst_33 = arith.constant -1.000000e+02 : f32
    %98 = vector.broadcast %cst_33 : f32 to vector<1x256xf32>
    %99 = arith.maximumf %97, %98 : vector<1x256xf32>
    %cst_34 = arith.constant 5.000000e-01 : f32
    %100 = vector.broadcast %cst_34 : f32 to vector<1x256xf32>
    %101 = arith.cmpf ogt, %36, %100 : vector<1x256xf32>
    %cst_35 = arith.constant -1.000000e+02 : f32
    %102 = vector.broadcast %cst_35 : f32 to vector<1x256xf32>
    %103 = arith.select %101, %94, %102 : vector<1x256xi1>, vector<1x256xf32>
    %cst_36 = arith.constant 5.000000e-01 : f32
    %104 = vector.broadcast %cst_36 : f32 to vector<1x256xf32>
    %105 = arith.cmpf ogt, %36, %104 : vector<1x256xf32>
    %cst_37 = arith.constant 0.000000e+00 : f32
    %106 = vector.broadcast %cst_37 : f32 to vector<1x256xf32>
    %107 = arith.select %105, %99, %106 : vector<1x256xi1>, vector<1x256xf32>
    %108 = arith.mulf %38, %103 : vector<1x256xf32>
    %cst_38 = arith.constant 1.000000e+00 : f32
    %109 = vector.broadcast %cst_38 : f32 to vector<1x256xf32>
    %110 = arith.subf %109, %38 : vector<1x256xf32>
    %111 = arith.mulf %110, %107 : vector<1x256xf32>
    %112 = arith.addf %108, %111 : vector<1x256xf32>
    %113 = vector.shape_cast %112 : vector<1x256xf32> to vector<1x1x256xf32>
    %cst_39 = arith.constant dense<0.000000e+00> : vector<1xf32>
    %114 = vector.multi_reduction <add>, %113, %cst_39 [1, 2] : vector<1x1x256xf32> to vector<1xf32>
    %115 = vector.shape_cast %114 : vector<1xf32> to vector<1x1x1xf32>
    %116 = vector.extract %115[0, 0, 0] : f32 from vector<1x1x1xf32>
    %cst_40 = arith.constant 0.000000e+00 : f32
    %117 = arith.subf %cst_40, %116 : f32
    %118 = vector.extract_strided_slice %6 {offsets = [4, 0], sizes = [1, 256], strides = [1, 1]} : vector<8x256xf32> to vector<1x256xf32>
    %119 = arith.mulf %36, %118 : vector<1x256xf32>
    %120 = arith.subf %119, %39 : vector<1x256xf32>
    %121 = arith.mulf %120, %120 : vector<1x256xf32>
    %122 = vector.shape_cast %121 : vector<1x256xf32> to vector<1x1x256xf32>
    %cst_41 = arith.constant dense<0.000000e+00> : vector<1xf32>
    %123 = vector.multi_reduction <add>, %122, %cst_41 [1, 2] : vector<1x1x256xf32> to vector<1xf32>
    %124 = vector.shape_cast %123 : vector<1xf32> to vector<1x1x1xf32>
    %125 = vector.extract %124[0, 0, 0] : f32 from vector<1x1x1xf32>
    %126 = vector.extract_strided_slice %6 {offsets = [1, 0], sizes = [2, 256], strides = [1, 1]} : vector<8x256xf32> to vector<2x256xf32>
    %127 = tpu.iota {dimensions = array<i32: 0>} : vector<5x256xi32>
    %c1_i32 = arith.constant 1 : i32
    %128 = vector.broadcast %c1_i32 : i32 to vector<5x256xi32>
    %129 = arith.addi %127, %128 : vector<5x256xi32>
    %130 = arith.sitofp %129 : vector<5x256xi32> to vector<5x256xf32>
    %131 = vector.broadcast %37 : vector<1x256xf32> to vector<5x256xf32>
    %132 = arith.cmpf oeq, %131, %130 : vector<5x256xf32>
    %133 = arith.extui %132 : vector<5x256xi1> to vector<5x256xi32>
    %134 = arith.sitofp %133 : vector<5x256xi32> to vector<5x256xf32>
    %cst_42 = arith.constant dense<0.000000e+00> : vector<5xf32>
    %135 = vector.multi_reduction <add>, %134, %cst_42 [1] : vector<5x256xf32> to vector<5xf32>
    %136 = vector.shape_cast %135 : vector<5xf32> to vector<5x1xf32>
    %cst_43 = arith.constant 1.000000e+00 : f32
    %137 = vector.broadcast %cst_43 : f32 to vector<5x1xf32>
    %138 = arith.maximumf %136, %137 : vector<5x1xf32>
    %cst_44 = arith.constant 0.000000e+00 : f32
    %139 = vector.broadcast %cst_44 : f32 to vector<5x1xf32>
    %140 = arith.cmpf ole, %136, %139 : vector<5x1xf32>
    %141 = arith.extui %140 : vector<5x1xi1> to vector<5x1xi32>
    %142 = arith.sitofp %141 : vector<5x1xi32> to vector<5x1xf32>
    %cst_45 = arith.constant dense<0.000000e+00> : vector<5x2xf32>
    %143 = tpu.matmul %134, %126, %cst_45 {dimension_numbers = #tpu.dot_dimension_numbers<[1], [1], [0], [0], [0, 0, 1, 0], [], []>} : vector<5x256xf32>, vector<2x256xf32>, vector<5x2xf32> -> vector<5x2xf32>
    %144 = vector.broadcast %138 : vector<5x1xf32> to vector<5x2xf32>
    %145 = arith.divf %143, %144 : vector<5x2xf32>
    %146 = arith.mulf %126, %126 : vector<2x256xf32>
    %cst_46 = arith.constant dense<0.000000e+00> : vector<256xf32>
    %147 = vector.multi_reduction <add>, %146, %cst_46 [0] : vector<2x256xf32> to vector<256xf32>
    %148 = vector.shape_cast %147 : vector<256xf32> to vector<1x256xf32>
    %149 = arith.mulf %145, %145 : vector<5x2xf32>
    %cst_47 = arith.constant dense<0.000000e+00> : vector<5xf32>
    %150 = vector.multi_reduction <add>, %149, %cst_47 [1] : vector<5x2xf32> to vector<5xf32>
    %151 = vector.shape_cast %150 : vector<5xf32> to vector<5x1xf32>
    %cst_48 = arith.constant dense<0.000000e+00> : vector<5x256xf32>
    %152 = tpu.matmul %145, %126, %cst_48 {dimension_numbers = #tpu.dot_dimension_numbers<[1], [0], [0], [1], [0, 0, 1, 1], [], []>} : vector<5x2xf32>, vector<2x256xf32>, vector<5x256xf32> -> vector<5x256xf32>
    %cst_49 = arith.constant 2.000000e+00 : f32
    %153 = vector.broadcast %cst_49 : f32 to vector<5x256xf32>
    %154 = arith.mulf %153, %152 : vector<5x256xf32>
    %155 = vector.broadcast %148 : vector<1x256xf32> to vector<5x256xf32>
    %156 = arith.subf %155, %154 : vector<5x256xf32>
    %157 = vector.broadcast %151 : vector<5x1xf32> to vector<5x256xf32>
    %158 = arith.addf %156, %157 : vector<5x256xf32>
    %cst_50 = arith.constant 0.000000e+00 : f32
    %159 = vector.broadcast %cst_50 : f32 to vector<5x256xf32>
    %160 = arith.maximumf %158, %159 : vector<5x256xf32>
    %161 = math.sqrt %160 : vector<5x256xf32>
    %cst_51 = arith.constant 1.000000e+00 : f32
    %162 = vector.broadcast %cst_51 : f32 to vector<5x256xf32>
    %163 = arith.subf %161, %162 : vector<5x256xf32>
    %cst_52 = arith.constant 0.000000e+00 : f32
    %164 = vector.broadcast %cst_52 : f32 to vector<5x256xf32>
    %165 = arith.maximumf %163, %164 : vector<5x256xf32>
    %166 = arith.mulf %165, %134 : vector<5x256xf32>
    %cst_53 = arith.constant dense<0.000000e+00> : vector<5xf32>
    %167 = vector.multi_reduction <add>, %166, %cst_53 [1] : vector<5x256xf32> to vector<5xf32>
    %168 = vector.shape_cast %167 : vector<5xf32> to vector<5x1xf32>
    %169 = arith.divf %168, %138 : vector<5x1xf32>
    %170 = vector.shape_cast %169 : vector<5x1xf32> to vector<1x5x1xf32>
    %cst_54 = arith.constant dense<0.000000e+00> : vector<1xf32>
    %171 = vector.multi_reduction <add>, %170, %cst_54 [1, 2] : vector<1x5x1xf32> to vector<1xf32>
    %172 = vector.shape_cast %171 : vector<1xf32> to vector<1x1x1xf32>
    %173 = vector.extract %172[0, 0, 0] : f32 from vector<1x1x1xf32>
    %174 = tpu.iota {dimensions = array<i32: 0>} : vector<5x1xi32>
    %c1_i32_55 = arith.constant 1 : i32
    %175 = vector.broadcast %c1_i32_55 : i32 to vector<5x1xi32>
    %176 = arith.addi %174, %175 : vector<5x1xi32>
    %177 = arith.sitofp %176 : vector<5x1xi32> to vector<5x1xf32>
    %cst_56 = arith.constant 1.000000e+04 : f32
    %178 = vector.broadcast %cst_56 : f32 to vector<5x1xf32>
    %179 = arith.mulf %142, %178 : vector<5x1xf32>
    %180 = arith.mulf %179, %177 : vector<5x1xf32>
    %181 = vector.broadcast %180 : vector<5x1xf32> to vector<5x2xf32>
    %182 = arith.addf %145, %181 : vector<5x2xf32>
    %cst_57 = arith.constant dense<0.000000e+00> : vector<5x5xf32>
    %183 = tpu.matmul %182, %182, %cst_57 {dimension_numbers = #tpu.dot_dimension_numbers<[1], [1], [0], [0], [0, 0, 1, 0], [], []>} : vector<5x2xf32>, vector<5x2xf32>, vector<5x5xf32> -> vector<5x5xf32>
    %184 = tpu.iota {dimensions = array<i32: 0>} : vector<5x5xi32>
    %185 = tpu.iota {dimensions = array<i32: 1>} : vector<5x5xi32>
    %186 = arith.cmpi eq, %184, %185 : vector<5x5xi32>
    %187 = arith.extui %186 : vector<5x5xi1> to vector<5x5xi32>
    %188 = arith.sitofp %187 : vector<5x5xi32> to vector<5x5xf32>
    %189 = arith.mulf %183, %188 : vector<5x5xf32>
    %cst_58 = arith.constant dense<0.000000e+00> : vector<5xf32>
    %190 = vector.multi_reduction <add>, %189, %cst_58 [1] : vector<5x5xf32> to vector<5xf32>
    %191 = vector.shape_cast %190 : vector<5xf32> to vector<5x1xf32>
    %192 = arith.mulf %183, %188 : vector<5x5xf32>
    %cst_59 = arith.constant dense<0.000000e+00> : vector<5xf32>
    %193 = vector.multi_reduction <add>, %192, %cst_59 [0] : vector<5x5xf32> to vector<5xf32>
    %194 = vector.shape_cast %193 : vector<5xf32> to vector<1x5xf32>
    %195 = vector.broadcast %191 : vector<5x1xf32> to vector<5x5xf32>
    %196 = vector.broadcast %194 : vector<1x5xf32> to vector<5x5xf32>
    %197 = arith.addf %195, %196 : vector<5x5xf32>
    %cst_60 = arith.constant 2.000000e+00 : f32
    %198 = vector.broadcast %cst_60 : f32 to vector<5x5xf32>
    %199 = arith.mulf %198, %183 : vector<5x5xf32>
    %200 = arith.subf %197, %199 : vector<5x5xf32>
    %cst_61 = arith.constant 0.000000e+00 : f32
    %201 = vector.broadcast %cst_61 : f32 to vector<5x5xf32>
    %202 = arith.maximumf %200, %201 : vector<5x5xf32>
    %203 = math.sqrt %202 : vector<5x5xf32>
    %cst_62 = arith.constant 1.000000e+00 : f32
    %204 = vector.broadcast %cst_62 : f32 to vector<5x5xf32>
    %205 = arith.subf %204, %188 : vector<5x5xf32>
    %cst_63 = arith.constant 5.000000e+00 : f32
    %206 = vector.broadcast %cst_63 : f32 to vector<5x5xf32>
    %207 = arith.subf %206, %203 : vector<5x5xf32>
    %cst_64 = arith.constant 0.000000e+00 : f32
    %208 = vector.broadcast %cst_64 : f32 to vector<5x5xf32>
    %209 = arith.maximumf %207, %208 : vector<5x5xf32>
    %210 = arith.mulf %205, %209 : vector<5x5xf32>
    %211 = vector.shape_cast %210 : vector<5x5xf32> to vector<1x5x5xf32>
    %cst_65 = arith.constant dense<0.000000e+00> : vector<1xf32>
    %212 = vector.multi_reduction <add>, %211, %cst_65 [1, 2] : vector<1x5x5xf32> to vector<1xf32>
    %213 = vector.shape_cast %212 : vector<1xf32> to vector<1x1x1xf32>
    %214 = vector.extract %213[0, 0, 0] : f32 from vector<1x1x1xf32>
    %cst_66 = arith.constant 1.000000e+00 : f32
    %215 = arith.mulf %cst_66, %173 : f32
    %cst_67 = arith.constant 1.000000e+00 : f32
    %216 = arith.mulf %cst_67, %214 : f32
    %217 = arith.addf %215, %216 : f32
    %218 = vector.extract_strided_slice %6 {offsets = [6, 0], sizes = [2, 256], strides = [1, 1]} : vector<8x256xf32> to vector<2x256xf32>
    %219 = tpu.iota {dimensions = array<i32: 0>} : vector<5x256xi32>
    %c1_i32_68 = arith.constant 1 : i32
    %220 = vector.broadcast %c1_i32_68 : i32 to vector<5x256xi32>
    %221 = arith.addi %219, %220 : vector<5x256xi32>
    %222 = arith.sitofp %221 : vector<5x256xi32> to vector<5x256xf32>
    %223 = vector.broadcast %41 : vector<1x256xf32> to vector<5x256xf32>
    %224 = arith.cmpf oeq, %223, %222 : vector<5x256xf32>
    %225 = arith.extui %224 : vector<5x256xi1> to vector<5x256xi32>
    %226 = arith.sitofp %225 : vector<5x256xi32> to vector<5x256xf32>
    %cst_69 = arith.constant dense<0.000000e+00> : vector<5xf32>
    %227 = vector.multi_reduction <add>, %226, %cst_69 [1] : vector<5x256xf32> to vector<5xf32>
    %228 = vector.shape_cast %227 : vector<5xf32> to vector<5x1xf32>
    %cst_70 = arith.constant 1.000000e+00 : f32
    %229 = vector.broadcast %cst_70 : f32 to vector<5x1xf32>
    %230 = arith.maximumf %228, %229 : vector<5x1xf32>
    %cst_71 = arith.constant 0.000000e+00 : f32
    %231 = vector.broadcast %cst_71 : f32 to vector<5x1xf32>
    %232 = arith.cmpf ole, %228, %231 : vector<5x1xf32>
    %233 = arith.extui %232 : vector<5x1xi1> to vector<5x1xi32>
    %234 = arith.sitofp %233 : vector<5x1xi32> to vector<5x1xf32>
    %cst_72 = arith.constant dense<0.000000e+00> : vector<5x2xf32>
    %235 = tpu.matmul %226, %218, %cst_72 {dimension_numbers = #tpu.dot_dimension_numbers<[1], [1], [0], [0], [0, 0, 1, 0], [], []>} : vector<5x256xf32>, vector<2x256xf32>, vector<5x2xf32> -> vector<5x2xf32>
    %236 = vector.broadcast %230 : vector<5x1xf32> to vector<5x2xf32>
    %237 = arith.divf %235, %236 : vector<5x2xf32>
    %238 = arith.mulf %218, %218 : vector<2x256xf32>
    %cst_73 = arith.constant dense<0.000000e+00> : vector<256xf32>
    %239 = vector.multi_reduction <add>, %238, %cst_73 [0] : vector<2x256xf32> to vector<256xf32>
    %240 = vector.shape_cast %239 : vector<256xf32> to vector<1x256xf32>
    %241 = arith.mulf %237, %237 : vector<5x2xf32>
    %cst_74 = arith.constant dense<0.000000e+00> : vector<5xf32>
    %242 = vector.multi_reduction <add>, %241, %cst_74 [1] : vector<5x2xf32> to vector<5xf32>
    %243 = vector.shape_cast %242 : vector<5xf32> to vector<5x1xf32>
    %cst_75 = arith.constant dense<0.000000e+00> : vector<5x256xf32>
    %244 = tpu.matmul %237, %218, %cst_75 {dimension_numbers = #tpu.dot_dimension_numbers<[1], [0], [0], [1], [0, 0, 1, 1], [], []>} : vector<5x2xf32>, vector<2x256xf32>, vector<5x256xf32> -> vector<5x256xf32>
    %cst_76 = arith.constant 2.000000e+00 : f32
    %245 = vector.broadcast %cst_76 : f32 to vector<5x256xf32>
    %246 = arith.mulf %245, %244 : vector<5x256xf32>
    %247 = vector.broadcast %240 : vector<1x256xf32> to vector<5x256xf32>
    %248 = arith.subf %247, %246 : vector<5x256xf32>
    %249 = vector.broadcast %243 : vector<5x1xf32> to vector<5x256xf32>
    %250 = arith.addf %248, %249 : vector<5x256xf32>
    %cst_77 = arith.constant 0.000000e+00 : f32
    %251 = vector.broadcast %cst_77 : f32 to vector<5x256xf32>
    %252 = arith.maximumf %250, %251 : vector<5x256xf32>
    %253 = math.sqrt %252 : vector<5x256xf32>
    %cst_78 = arith.constant 1.000000e+00 : f32
    %254 = vector.broadcast %cst_78 : f32 to vector<5x256xf32>
    %255 = arith.subf %253, %254 : vector<5x256xf32>
    %cst_79 = arith.constant 0.000000e+00 : f32
    %256 = vector.broadcast %cst_79 : f32 to vector<5x256xf32>
    %257 = arith.maximumf %255, %256 : vector<5x256xf32>
    %258 = arith.mulf %257, %226 : vector<5x256xf32>
    %cst_80 = arith.constant dense<0.000000e+00> : vector<5xf32>
    %259 = vector.multi_reduction <add>, %258, %cst_80 [1] : vector<5x256xf32> to vector<5xf32>
    %260 = vector.shape_cast %259 : vector<5xf32> to vector<5x1xf32>
    %261 = arith.divf %260, %230 : vector<5x1xf32>
    %262 = vector.shape_cast %261 : vector<5x1xf32> to vector<1x5x1xf32>
    %cst_81 = arith.constant dense<0.000000e+00> : vector<1xf32>
    %263 = vector.multi_reduction <add>, %262, %cst_81 [1, 2] : vector<1x5x1xf32> to vector<1xf32>
    %264 = vector.shape_cast %263 : vector<1xf32> to vector<1x1x1xf32>
    %265 = vector.extract %264[0, 0, 0] : f32 from vector<1x1x1xf32>
    %266 = tpu.iota {dimensions = array<i32: 0>} : vector<5x1xi32>
    %c1_i32_82 = arith.constant 1 : i32
    %267 = vector.broadcast %c1_i32_82 : i32 to vector<5x1xi32>
    %268 = arith.addi %266, %267 : vector<5x1xi32>
    %269 = arith.sitofp %268 : vector<5x1xi32> to vector<5x1xf32>
    %cst_83 = arith.constant 1.000000e+04 : f32
    %270 = vector.broadcast %cst_83 : f32 to vector<5x1xf32>
    %271 = arith.mulf %234, %270 : vector<5x1xf32>
    %272 = arith.mulf %271, %269 : vector<5x1xf32>
    %273 = vector.broadcast %272 : vector<5x1xf32> to vector<5x2xf32>
    %274 = arith.addf %237, %273 : vector<5x2xf32>
    %cst_84 = arith.constant dense<0.000000e+00> : vector<5x5xf32>
    %275 = tpu.matmul %274, %274, %cst_84 {dimension_numbers = #tpu.dot_dimension_numbers<[1], [1], [0], [0], [0, 0, 1, 0], [], []>} : vector<5x2xf32>, vector<5x2xf32>, vector<5x5xf32> -> vector<5x5xf32>
    %276 = tpu.iota {dimensions = array<i32: 0>} : vector<5x5xi32>
    %277 = tpu.iota {dimensions = array<i32: 1>} : vector<5x5xi32>
    %278 = arith.cmpi eq, %276, %277 : vector<5x5xi32>
    %279 = arith.extui %278 : vector<5x5xi1> to vector<5x5xi32>
    %280 = arith.sitofp %279 : vector<5x5xi32> to vector<5x5xf32>
    %281 = arith.mulf %275, %280 : vector<5x5xf32>
    %cst_85 = arith.constant dense<0.000000e+00> : vector<5xf32>
    %282 = vector.multi_reduction <add>, %281, %cst_85 [1] : vector<5x5xf32> to vector<5xf32>
    %283 = vector.shape_cast %282 : vector<5xf32> to vector<5x1xf32>
    %284 = arith.mulf %275, %280 : vector<5x5xf32>
    %cst_86 = arith.constant dense<0.000000e+00> : vector<5xf32>
    %285 = vector.multi_reduction <add>, %284, %cst_86 [0] : vector<5x5xf32> to vector<5xf32>
    %286 = vector.shape_cast %285 : vector<5xf32> to vector<1x5xf32>
    %287 = vector.broadcast %283 : vector<5x1xf32> to vector<5x5xf32>
    %288 = vector.broadcast %286 : vector<1x5xf32> to vector<5x5xf32>
    %289 = arith.addf %287, %288 : vector<5x5xf32>
    %cst_87 = arith.constant 2.000000e+00 : f32
    %290 = vector.broadcast %cst_87 : f32 to vector<5x5xf32>
    %291 = arith.mulf %290, %275 : vector<5x5xf32>
    %292 = arith.subf %289, %291 : vector<5x5xf32>
    %cst_88 = arith.constant 0.000000e+00 : f32
    %293 = vector.broadcast %cst_88 : f32 to vector<5x5xf32>
    %294 = arith.maximumf %292, %293 : vector<5x5xf32>
    %295 = math.sqrt %294 : vector<5x5xf32>
    %cst_89 = arith.constant 1.000000e+00 : f32
    %296 = vector.broadcast %cst_89 : f32 to vector<5x5xf32>
    %297 = arith.subf %296, %280 : vector<5x5xf32>
    %cst_90 = arith.constant 5.000000e+00 : f32
    %298 = vector.broadcast %cst_90 : f32 to vector<5x5xf32>
    %299 = arith.subf %298, %295 : vector<5x5xf32>
    %cst_91 = arith.constant 0.000000e+00 : f32
    %300 = vector.broadcast %cst_91 : f32 to vector<5x5xf32>
    %301 = arith.maximumf %299, %300 : vector<5x5xf32>
    %302 = arith.mulf %297, %301 : vector<5x5xf32>
    %303 = vector.shape_cast %302 : vector<5x5xf32> to vector<1x5x5xf32>
    %cst_92 = arith.constant dense<0.000000e+00> : vector<1xf32>
    %304 = vector.multi_reduction <add>, %303, %cst_92 [1, 2] : vector<1x5x5xf32> to vector<1xf32>
    %305 = vector.shape_cast %304 : vector<1xf32> to vector<1x1x1xf32>
    %306 = vector.extract %305[0, 0, 0] : f32 from vector<1x1x1xf32>
    %cst_93 = arith.constant 1.000000e+00 : f32
    %307 = arith.mulf %cst_93, %265 : f32
    %cst_94 = arith.constant 1.000000e+00 : f32
    %308 = arith.mulf %cst_94, %306 : f32
    %309 = arith.addf %307, %308 : f32
    %310 = tpu.iota {dimensions = array<i32: 2>} : vector<1x1x128xi32>
    %c0_i32 = arith.constant 0 : i32
    %311 = vector.broadcast %c0_i32 : i32 to vector<1x1x128xi32>
    %312 = arith.cmpi eq, %310, %311 : vector<1x1x128xi32>
    %313 = arith.extui %312 : vector<1x1x128xi1> to vector<1x1x128xi32>
    %314 = arith.sitofp %313 : vector<1x1x128xi32> to vector<1x1x128xf32>
    %315 = vector.broadcast %55 : f32 to vector<1x1x128xf32>
    %316 = arith.mulf %314, %315 : vector<1x1x128xf32>
    %c1_i32_95 = arith.constant 1 : i32
    %317 = vector.broadcast %c1_i32_95 : i32 to vector<1x1x128xi32>
    %318 = arith.cmpi eq, %310, %317 : vector<1x1x128xi32>
    %319 = arith.extui %318 : vector<1x1x128xi1> to vector<1x1x128xi32>
    %320 = arith.sitofp %319 : vector<1x1x128xi32> to vector<1x1x128xf32>
    %321 = vector.broadcast %60 : f32 to vector<1x1x128xf32>
    %322 = arith.mulf %320, %321 : vector<1x1x128xf32>
    %c2_i32 = arith.constant 2 : i32
    %323 = vector.broadcast %c2_i32 : i32 to vector<1x1x128xi32>
    %324 = arith.cmpi eq, %310, %323 : vector<1x1x128xi32>
    %325 = arith.extui %324 : vector<1x1x128xi1> to vector<1x1x128xi32>
    %326 = arith.sitofp %325 : vector<1x1x128xi32> to vector<1x1x128xf32>
    %327 = vector.broadcast %65 : f32 to vector<1x1x128xf32>
    %328 = arith.mulf %326, %327 : vector<1x1x128xf32>
    %c3_i32 = arith.constant 3 : i32
    %329 = vector.broadcast %c3_i32 : i32 to vector<1x1x128xi32>
    %330 = arith.cmpi eq, %310, %329 : vector<1x1x128xi32>
    %331 = arith.extui %330 : vector<1x1x128xi1> to vector<1x1x128xi32>
    %332 = arith.sitofp %331 : vector<1x1x128xi32> to vector<1x1x128xf32>
    %333 = vector.broadcast %117 : f32 to vector<1x1x128xf32>
    %334 = arith.mulf %332, %333 : vector<1x1x128xf32>
    %c4_i32 = arith.constant 4 : i32
    %335 = vector.broadcast %c4_i32 : i32 to vector<1x1x128xi32>
    %336 = arith.cmpi eq, %310, %335 : vector<1x1x128xi32>
    %337 = arith.extui %336 : vector<1x1x128xi1> to vector<1x1x128xi32>
    %338 = arith.sitofp %337 : vector<1x1x128xi32> to vector<1x1x128xf32>
    %339 = vector.broadcast %125 : f32 to vector<1x1x128xf32>
    %340 = arith.mulf %338, %339 : vector<1x1x128xf32>
    %c5_i32 = arith.constant 5 : i32
    %341 = vector.broadcast %c5_i32 : i32 to vector<1x1x128xi32>
    %342 = arith.cmpi eq, %310, %341 : vector<1x1x128xi32>
    %343 = arith.extui %342 : vector<1x1x128xi1> to vector<1x1x128xi32>
    %344 = arith.sitofp %343 : vector<1x1x128xi32> to vector<1x1x128xf32>
    %345 = vector.broadcast %217 : f32 to vector<1x1x128xf32>
    %346 = arith.mulf %344, %345 : vector<1x1x128xf32>
    %c6_i32 = arith.constant 6 : i32
    %347 = vector.broadcast %c6_i32 : i32 to vector<1x1x128xi32>
    %348 = arith.cmpi eq, %310, %347 : vector<1x1x128xi32>
    %349 = arith.extui %348 : vector<1x1x128xi1> to vector<1x1x128xi32>
    %350 = arith.sitofp %349 : vector<1x1x128xi32> to vector<1x1x128xf32>
    %351 = vector.broadcast %79 : f32 to vector<1x1x128xf32>
    %352 = arith.mulf %350, %351 : vector<1x1x128xf32>
    %c7_i32 = arith.constant 7 : i32
    %353 = vector.broadcast %c7_i32 : i32 to vector<1x1x128xi32>
    %354 = arith.cmpi eq, %310, %353 : vector<1x1x128xi32>
    %355 = arith.extui %354 : vector<1x1x128xi1> to vector<1x1x128xi32>
    %356 = arith.sitofp %355 : vector<1x1x128xi32> to vector<1x1x128xf32>
    %357 = vector.broadcast %84 : f32 to vector<1x1x128xf32>
    %358 = arith.mulf %356, %357 : vector<1x1x128xf32>
    %c8_i32 = arith.constant 8 : i32
    %359 = vector.broadcast %c8_i32 : i32 to vector<1x1x128xi32>
    %360 = arith.cmpi eq, %310, %359 : vector<1x1x128xi32>
    %361 = arith.extui %360 : vector<1x1x128xi1> to vector<1x1x128xi32>
    %362 = arith.sitofp %361 : vector<1x1x128xi32> to vector<1x1x128xf32>
    %363 = vector.broadcast %89 : f32 to vector<1x1x128xf32>
    %364 = arith.mulf %362, %363 : vector<1x1x128xf32>
    %c9_i32 = arith.constant 9 : i32
    %365 = vector.broadcast %c9_i32 : i32 to vector<1x1x128xi32>
    %366 = arith.cmpi eq, %310, %365 : vector<1x1x128xi32>
    %367 = arith.extui %366 : vector<1x1x128xi1> to vector<1x1x128xi32>
    %368 = arith.sitofp %367 : vector<1x1x128xi32> to vector<1x1x128xf32>
    %369 = vector.broadcast %309 : f32 to vector<1x1x128xf32>
    %370 = arith.mulf %368, %369 : vector<1x1x128xf32>
    %371 = arith.addf %316, %322 : vector<1x1x128xf32>
    %372 = arith.addf %328, %334 : vector<1x1x128xf32>
    %373 = arith.addf %340, %346 : vector<1x1x128xf32>
    %374 = arith.addf %352, %358 : vector<1x1x128xf32>
    %375 = arith.addf %364, %370 : vector<1x1x128xf32>
    %376 = arith.addf %371, %372 : vector<1x1x128xf32>
    %377 = arith.addf %373, %374 : vector<1x1x128xf32>
    %378 = arith.addf %376, %377 : vector<1x1x128xf32>
    %379 = arith.addf %378, %375 : vector<1x1x128xf32>
    %c0_96 = arith.constant 0 : index
    %c0_97 = arith.constant 0 : index
    %c0_98 = arith.constant 0 : index
    %380 = vector.load %arg6[%c0_96, %c0_97, %c0_98] : memref<1x1x128xf32, #tpu.memory_space<vmem>>, vector<1x1x128xf32>
    tpu.vector_store %arg6[%c0_96, %c0_97, %c0_98], %379 {strides = array<i32>} : memref<1x1x128xf32, #tpu.memory_space<vmem>>, vector<1x1x128xf32>,
    return
  }
  func.func @transform_0(%arg0: i32) -> (i32, i32, i32) {
    %c0_i32 = arith.constant 0 : i32
    %c0_i32_0 = arith.constant 0 : i32
    %c0_i32_1 = arith.constant 0 : i32
    return %arg0, %c0_i32, %c0_i32_0 : i32, i32, i32
  }
  func.func @transform_1(%arg0: i32) -> (i32, i32) {
    %c0_i32 = arith.constant 0 : i32
    %c0_i32_0 = arith.constant 0 : i32
    %c0_i32_1 = arith.constant 0 : i32
    return %c0_i32, %c0_i32_0 : i32, i32
  }
  func.func @transform_2(%arg0: i32) -> (i32, i32) {
    %c0_i32 = arith.constant 0 : i32
    %c0_i32_0 = arith.constant 0 : i32
    %c0_i32_1 = arith.constant 0 : i32
    return %c0_i32, %c0_i32_0 : i32, i32
  }
  func.func @transform_3(%arg0: i32) -> (i32, i32, i32) {
    %c0_i32 = arith.constant 0 : i32
    %c0_i32_0 = arith.constant 0 : i32
    %c0_i32_1 = arith.constant 0 : i32
    return %arg0, %c0_i32, %c0_i32_0 : i32, i32, i32
  }
  func.func @transform_4(%arg0: i32) -> (i32, i32, i32) {
    %c0_i32 = arith.constant 0 : i32
    %c0_i32_0 = arith.constant 0 : i32
    %c0_i32_1 = arith.constant 0 : i32
    return %arg0, %c0_i32, %c0_i32_0 : i32, i32, i32
  }
  func.func @transform_5(%arg0: i32) -> (i32, i32, i32) {
    %c0_i32 = arith.constant 0 : i32
    %c0_i32_0 = arith.constant 0 : i32
    %c0_i32_1 = arith.constant 0 : i32
    return %arg0, %c0_i32, %c0_i32_0 : i32, i32, i32
  }
}

</mosaic_0001>

<llo_original>
// kernel: combine_forward.1
$region0: #{combine_forward.1}
  #allocation0 [shape = 'u32[]', space=smem, size = 0x4, offset = 0x4, fixed_abs, tag = 'smem constant byte address 0x4 - core index']
  #allocation1 [shape = 'u32[72,128]{1,0:T(1,128)}', space=vmem, size = 0x9000, scoped, tag = 'internal scratch']
  %s0 = inlined_call_operand.vmem [shape: f32[2,4,256], index: 0, kind: input, shape index: {}]
  %s1 = inlined_call_operand.vmem [shape: f32[8,4], index: 1, kind: input, shape index: {}]
  %s2 = inlined_call_operand.vmem [shape: f32[8,1], index: 2, kind: input, shape index: {}]
  %s3 = inlined_call_operand.vmem [shape: f32[2,6,256], index: 3, kind: input, shape index: {}]
  %s4 = inlined_call_operand.vmem [shape: f32[2,1,256], index: 4, kind: output, shape index: {0}]
  %s5 = inlined_call_operand.vmem [shape: f32[2,1,128], index: 5, kind: output, shape index: {1}]
  %6 = xla_tuple %s4, %s5
  %s7 = sld [smem:[#allocation0]]
  $region57: #{combine_forward.1} parent=0
    _
  %s9 = ssub.s32 1, %s7
  %s10 = scalar_select 0, %s9, %s7
  loop: start=0, step=1, limit=4
  $region2: #{combine_forward.1} parent=0 // loop_pre_header
    _
  $region3: #{combine_forward.1} parent=0 // loop_header
    %s12 = sphi 0, %s16
    %p13 = scmp.ge.s32.totalorder %s12, 4
    %s22 = sphi 0, %s24
    %s25 = sphi 0, %s22
    %s26 = sphi 0, %s25
    %s42 = sphi 0, %s26
    %s46 = sphi 0, %s46
    %s48 = sphi 0, %s46
    %s49 = sphi 0, %s48
    %s63 = sphi 0, %s49
    %s67 = sphi 0, %s67
    %s69 = sphi 0, %s67
    %s70 = sphi 0, %s69
    %s84 = sphi 0, %s70
    %s90 = sphi 0, %s92
    %s93 = sphi 0, %s90
    %s94 = sphi 0, %s93
    %s110 = sphi 0, %s94
    %s116 = sphi 0, %s118
    %s119 = sphi 0, %s116
    %s120 = sphi 0, %s119
    %s136 = sphi 0, %s120
    %s142 = sphi 0, %s144
    %s145 = sphi 0, %s142
    %s146 = sphi 0, %s145
    %s162 = sphi 0, %s146
  $region4: #{combine_forward.1} parent=0 // loop_header_branch
    %15 = sbr.rel (%p13) target = $region8
  $region5: #{combine_forward.1} parent=0 // loop_body
    %s17 = ssub.s32 %s12, 1
    %s18 = ssub.s32 %s12, 2
    %s19 = sadd.s32 %s12, 1
    %s20 = ssub.s32 %s12, %s19
    %p21 = scmp.eq.s32.totalorder %s20, 0
    %s23 = sadd.s32 %s22, 1
    %s24 = scalar_select %p21, %s22, %s23
    %p27 = pneg %p21
    %p28 = scmp.eq.s32.totalorder %s12, 1
    %p29 = por %p27, %p28
    %p30 = scmp.ne.s32.totalorder %s22, %s25
    %p31 = scmp.eq.s32.totalorder %s12, 0
    %p32 = por %p30, %p31
    %p33 = scmp.ne.s32.totalorder %s22, %s25
    %p34 = scmp.eq.s32.totalorder %s17, 1
    %p35 = por %p33, %p34
    %p36 = scmp.ne.s32.totalorder %s25, %s26
    %p37 = scmp.eq.s32.totalorder %s17, 0
    %p38 = por %p36, %p37
    %p39 = scmp.ne.s32.totalorder %s25, %s26
    %p40 = scmp.eq.s32.totalorder %s18, 1
    %p41 = por %p39, %p40
    %p43 = scmp.ne.s32.totalorder %s26, %s42
    %p44 = scmp.eq.s32.totalorder %s18, 0
    %p45 = por %p43, %p44
    %s47 = sadd.s32 %s46, 1
    %p50 = scmp.eq.s32.totalorder %s12, 1
    %p51 = scmp.ne.s32.totalorder %s46, %s48
    %p52 = scmp.eq.s32.totalorder %s12, 0
    %p53 = por %p51, %p52
    %p54 = scmp.ne.s32.totalorder %s46, %s48
    %p55 = scmp.eq.s32.totalorder %s17, 1
    %p56 = por %p54, %p55
    %p57 = scmp.ne.s32.totalorder %s48, %s49
    %p58 = scmp.eq.s32.totalorder %s17, 0
    %p59 = por %p57, %p58
    %p60 = scmp.ne.s32.totalorder %s48, %s49
    %p61 = scmp.eq.s32.totalorder %s18, 1
    %p62 = por %p60, %p61
    %p64 = scmp.ne.s32.totalorder %s49, %s63
    %p65 = scmp.eq.s32.totalorder %s18, 0
    %p66 = por %p64, %p65
    %s68 = sadd.s32 %s67, 1
    %p71 = scmp.eq.s32.totalorder %s12, 1
    %p72 = scmp.ne.s32.totalorder %s67, %s69
    %p73 = scmp.eq.s32.totalorder %s12, 0
    %p74 = por %p72, %p73
    %p75 = scmp.ne.s32.totalorder %s67, %s69
    %p76 = scmp.eq.s32.totalorder %s17, 1
    %p77 = por %p75, %p76
    %p78 = scmp.ne.s32.totalorder %s69, %s70
    %p79 = scmp.eq.s32.totalorder %s17, 0
    %p80 = por %p78, %p79
    %p81 = scmp.ne.s32.totalorder %s69, %s70
    %p82 = scmp.eq.s32.totalorder %s18, 1
    %p83 = por %p81, %p82
    %p85 = scmp.ne.s32.totalorder %s70, %s84
    %p86 = scmp.eq.s32.totalorder %s18, 0
    %p87 = por %p85, %p86
    %s88 = ssub.s32 %s12, %s19
    %p89 = scmp.eq.s32.totalorder %s88, 0
    %s91 = sadd.s32 %s90, 1
    %s92 = scalar_select %p89, %s90, %s91
    %p95 = pneg %p89
    %p96 = scmp.eq.s32.totalorder %s12, 1
    %p97 = por %p95, %p96
    %p98 = scmp.ne.s32.totalorder %s90, %s93
    %p99 = scmp.eq.s32.totalorder %s12, 0
    %p100 = por %p98, %p99
    %p101 = scmp.ne.s32.totalorder %s90, %s93
    %p102 = scmp.eq.s32.totalorder %s17, 1
    %p103 = por %p101, %p102
    %p104 = scmp.ne.s32.totalorder %s93, %s94
    %p105 = scmp.eq.s32.totalorder %s17, 0
    %p106 = por %p104, %p105
    %p107 = scmp.ne.s32.totalorder %s93, %s94
    %p108 = scmp.eq.s32.totalorder %s18, 1
    %p109 = por %p107, %p108
    %p111 = scmp.ne.s32.totalorder %s94, %s110
    %p112 = scmp.eq.s32.totalorder %s18, 0
    %p113 = por %p111, %p112
    %s114 = ssub.s32 %s12, %s19
    %p115 = scmp.eq.s32.totalorder %s114, 0
    %s117 = sadd.s32 %s116, 1
    %s118 = scalar_select %p115, %s116, %s117
    %p121 = pneg %p115
    %p122 = scmp.eq.s32.totalorder %s12, 1
    %p123 = por %p121, %p122
    %p124 = scmp.ne.s32.totalorder %s116, %s119
    %p125 = scmp.eq.s32.totalorder %s12, 0
    %p126 = por %p124, %p125
    %p127 = scmp.ne.s32.totalorder %s116, %s119
    %p128 = scmp.eq.s32.totalorder %s17, 1
    %p129 = por %p127, %p128
    %p130 = scmp.ne.s32.totalorder %s119, %s120
    %p131 = scmp.eq.s32.totalorder %s17, 0
    %p132 = por %p130, %p131
    %p133 = scmp.ne.s32.totalorder %s119, %s120
    %p134 = scmp.eq.s32.totalorder %s18, 1
    %p135 = por %p133, %p134
    %p137 = scmp.ne.s32.totalorder %s120, %s136
    %p138 = scmp.eq.s32.totalorder %s18, 0
    %p139 = por %p137, %p138
    %s140 = ssub.s32 %s12, %s19
    %p141 = scmp.eq.s32.totalorder %s140, 0
    %s143 = sadd.s32 %s142, 1
    %s144 = scalar_select %p141, %s142, %s143
    %p147 = pneg %p141
    %p148 = scmp.eq.s32.totalorder %s12, 1
    %p149 = por %p147, %p148
    %p150 = scmp.ne.s32.totalorder %s142, %s145
    %p151 = scmp.eq.s32.totalorder %s12, 0
    %p152 = por %p150, %p151
    %p153 = scmp.ne.s32.totalorder %s142, %s145
    %p154 = scmp.eq.s32.totalorder %s17, 1
    %p155 = por %p153, %p154
    %p156 = scmp.ne.s32.totalorder %s145, %s146
    %p157 = scmp.eq.s32.totalorder %s17, 0
    %p158 = por %p156, %p157
    %p159 = scmp.ne.s32.totalorder %s145, %s146
    %p160 = scmp.eq.s32.totalorder %s18, 1
    %p161 = por %p159, %p160
    %p163 = scmp.ne.s32.totalorder %s146, %s162
    %p164 = scmp.eq.s32.totalorder %s18, 0
    %p165 = por %p163, %p164
    %p166 = scmp.le.s32.totalorder 1, %s12
    %p167 = scmp.lt.s32.totalorder %s12, 3
    %p168 = pnand %p166, %p167
    %p169 = pneg %p168
    // Predicated region
    $region9: #{combine_forward.1} parent=5 // pred_check
      _
    $region10: #{combine_forward.1} parent=5 // pred_check_branch
      %171 = sbr.rel (%p168) target = $region12
    $region11: #{combine_forward.1} parent=5 // pred_region
      %s172 = ssub.s32 %s12, 1
      // Predicated region
      $region13: #{combine_forward.1} parent=11 // pred_check
        %p173 = pneg %p59
      $region14: #{combine_forward.1} parent=11 // pred_check_branch
        %175 = sbr.rel (%p173) target = $region16
      $region15: #{combine_forward.1} parent=11 // pred_region
        _
      $region16: #{combine_forward.1} parent=11 // pred_fallthru
        _
      // Predicated region
      $region17: #{combine_forward.1} parent=11 // pred_check
        %p176 = pneg %p80
      $region18: #{combine_forward.1} parent=11 // pred_check_branch
        %178 = sbr.rel (%p176) target = $region20
      $region19: #{combine_forward.1} parent=11 // pred_region
        _
      $region20: #{combine_forward.1} parent=11 // pred_fallthru
        _
    $region12: #{combine_forward.1} parent=5 // pred_fallthru
      _
    %p179 = scmp.lt.s32.totalorder %s12, 2
    // Predicated region
    $region21: #{combine_forward.1} parent=5 // pred_check
      %p180 = pneg %p179
    $region22: #{combine_forward.1} parent=5 // pred_check_branch
      %182 = sbr.rel (%p180) target = $region24
    $region23: #{combine_forward.1} parent=5 // pred_region
      // Predicated region
      $region25: #{combine_forward.1} parent=23 // pred_check
        %p183 = pneg %p32
      $region26: #{combine_forward.1} parent=23 // pred_check_branch
        %185 = sbr.rel (%p183) target = $region28
      $region27: #{combine_forward.1} parent=23 // pred_region
        %p186 = scmp.lt.s32.totalorder %s12, 1
        %s187 = scalar_select %p186, %s12, 1
        %s188 = smul.addr %s187, 2
        %s189 = smul.addr %s188, 4
        %s190 = scalar_lea.vmem %s0, %s189
      $region28: #{combine_forward.1} parent=23 // pred_fallthru
        _
      // Predicated region
      $region29: #{combine_forward.1} parent=23 // pred_check
        %p191 = pneg %p100
      $region30: #{combine_forward.1} parent=23 // pred_check_branch
        %193 = sbr.rel (%p191) target = $region32
      $region31: #{combine_forward.1} parent=23 // pred_region
        %p194 = scmp.lt.s32.totalorder %s12, 1
        %s195 = scalar_select %p194, %s12, 1
        %s196 = smul.addr %s195, 2
        %s197 = smul.addr %s196, 8
        %s198 = scalar_lea.vmem %s3, %s197
      $region32: #{combine_forward.1} parent=23 // pred_fallthru
        _
    $region24: #{combine_forward.1} parent=5 // pred_fallthru
      _
    %p199 = scmp.le.s32.totalorder 1, %s12
    %p200 = scmp.lt.s32.totalorder %s12, 3
    %p201 = pnand %p199, %p200
    %p202 = pneg %p201
    // Predicated region
    $region33: #{combine_forward.1} parent=5 // pred_check
      _
    $region34: #{combine_forward.1} parent=5 // pred_check_branch
      %204 = sbr.rel (%p201) target = $region36
    $region35: #{combine_forward.1} parent=5 // pred_region
      %s205 = ssub.s32 %s12, 1
      %p206 = scmp.lt.s32.totalorder %s17, 1
      %s207 = scalar_select %p206, %s17, 1
      %s208 = smul.addr %s207, 2
      %s209 = smul.addr %s208, 4
      %s210 = scalar_lea.vmem %s0, %s209
      %p211 = pneg %p38
      %p212 = pneg %p35
      %p213 = pneg %p59
      %p214 = pneg %p56
      %p215 = pneg %p80
      %p216 = pneg %p77
      %p217 = scmp.lt.s32.totalorder %s17, 1
      %s218 = scalar_select %p217, %s17, 1
      %s219 = smul.addr %s218, 2
      %s220 = smul.addr %s219, 8
      %s221 = scalar_lea.vmem %s3, %s220
      %p222 = pneg %p106
      %p223 = pneg %p103
      %p224 = pneg %p132
      %p225 = pneg %p129
      %p226 = scmp.lt.s32.totalorder %s17, 1
      %s227 = scalar_select %p226, %s17, 1
      %s228 = smul.addr %s227, 2
      %s229 = scalar_lea.vmem %s4, %s228
      %p230 = pneg %p158
      %p231 = pneg %p155
      %p232 = scmp.lt.s32.totalorder %s17, 1
      %s233 = scalar_select %p232, %s17, 1
      %s234 = scalar_lea.vmem %s5, %s233
      %p235 = scmp.lt.s32.totalorder %s17, 1
      %s236 = scalar_select %p235, %s17, 1
      %s237 = smul.addr %s236, 2
      %s238 = smul.addr %s237, 4
      %s239 = scalar_lea.vmem %s0, %s238
      %p240 = scmp.lt.s32.totalorder %s17, 1
      %s241 = scalar_select %p240, %s17, 1
      %s242 = smul.addr %s241, 2
      %s243 = smul.addr %s242, 8
      %s244 = scalar_lea.vmem %s3, %s243
      %p245 = scmp.lt.s32.totalorder %s17, 1
      %s246 = scalar_select %p245, %s17, 1
      %s247 = smul.addr %s246, 2
      %s248 = scalar_lea.vmem %s4, %s247
      %p249 = scmp.lt.s32.totalorder %s17, 1
      %s250 = scalar_select %p249, %s17, 1
      %s251 = scalar_lea.vmem %s5, %s250
      %v252 = vld [vmem:[%s239] sm:$0xff]
      %v253 = vld [vmem:[%s1] sm:$0xff]
      %v254 = vld [vmem:[%s2] sm:$0xff]
      %256 = vset.pattern.permute.xlu0 0
      %257 = vperm.xlu0 %256, %v254
      %v258 = vpop.permute.xlu0 %257
      %261 = vst [vmem:[#allocation1] ss:$2 sm:$0xff] %v252
      %v262 = vld.sshfl [vmem:[#allocation1] sm:$0xff pattern:$0x75316420]
      %v263 = vld.sshfl [vmem:[#allocation1 + $0x8] sm:$0xff pattern:$0x75316420]
      %vm264 = vcmask 31744
      %v266 = vsel %vm264, %v253, 0
      %vm268 = vcmask 1043456
      %v269 = vsel %vm268, %v262, 0
      %v271 = vsel %vm268, %v263, 0
      %273 = vmatpush.msra.mxu0 0.0
      %274 = vmatpush.msra.mxu0 0.0
      %275 = vmatpush.msra.mxu0 0.0
      %276 = vmatpush.msra.mxu0 0.0
      %277 = vmatpush.msra.mxu0 0.0
      %278 = vmatpush.msra.mxu0 0.0
      %279 = vmatpush.msra.mxu0 0.0
      %280 = vmatpush.msra.mxu0 0.0
      %281 = vmatpush.msra.mxu0 0.0
      %282 = vmatpush.msra.mxu0 0.0
      %283 = vmatpush.msra.mxu0 0.0
      %284 = vmatpush.msra.mxu0 0.0
      %285 = vmatpush.msra.mxu0 0.0
      %286 = vmatpush.msra.mxu0 0.0
      %287 = vmatpush.msra.mxu0 0.0
      %288 = vmatpush.msra.mxu0 %v269
      %289 = vmatmul.f32.gmra.mxu0 %v266
      %v290 = vpop.f32.mrf.mxu0
      %v291 = vadd.f32 %v258, %v290
      %292 = vdwg.mxu0
      %293 = vmatpush.msra.mxu0 0.0
      %294 = vmatpush.msra.mxu0 0.0
      %295 = vmatpush.msra.mxu0 0.0
      %296 = vmatpush.msra.mxu0 0.0
      %297 = vmatpush.msra.mxu0 0.0
      %298 = vmatpush.msra.mxu0 0.0
      %299 = vmatpush.msra.mxu0 0.0
      %300 = vmatpush.msra.mxu0 0.0
      %301 = vmatpush.msra.mxu0 0.0
      %302 = vmatpush.msra.mxu0 0.0
      %303 = vmatpush.msra.mxu0 0.0
      %304 = vmatpush.msra.mxu0 0.0
      %305 = vmatpush.msra.mxu0 0.0
      %306 = vmatpush.msra.mxu0 0.0
      %307 = vmatpush.msra.mxu0 0.0
      %308 = vmatpush.msra.mxu0 %v271
      %309 = vmatmul.f32.gmra.mxu0 %v266
      %v310 = vpop.f32.mrf.mxu0
      %v311 = vadd.f32 %v258, %v310
      %312 = vdwg.mxu0
      %v313 = vand.u32 2147483647, %v291
      %v314 = vand.u32 2147483647, %v311
      %v315 = vsub.f32 0.0, %v313
      %v316 = vsub.f32 0.0, %v314
      %v317 = vmul.f32 %v315, 1.442695
      %v318 = vpow.pop %v317
      %v319 = vmul.f32 %v316, 1.442695
      %v320 = vpow.pop %v319
      %v321 = vadd.f32 %v318, 1.0
      %v322 = vadd.f32 %v320, 1.0
      %v323 = vlog2.pop %v321
      %v324 = vmul.f32 %v323, 0.6931472
      %v325 = vlog2.pop %v322
      %v326 = vmul.f32 %v325, 0.6931472
      %v327 = vsub.f32 0.0, %v291
      %v328 = vsub.f32 0.0, %v311
      %v329 = vmax.f32 %v327, 0.0
      %v330 = vmax.f32 %v328, 0.0
      %v331 = vadd.f32 %v329, %v324
      %v332 = vadd.f32 %v330, %v326
      %v333 = vmax.f32 %v291, 0.0
      %v334 = vmax.f32 %v311, 0.0
      %v335 = vadd.f32 %v333, %v324
      %v336 = vadd.f32 %v334, %v326
      %v337 = vrcp.pop %v321
      %v338 = vmul.f32 %v321, %v337
      %v339 = vsub.f32 1.0, %v338
      %v340 = vmul.f32 %v337, %v339
      %v341 = vadd.f32 %v337, %v340
      %vm342 = vweird.f32 %v321
      %vm343 = vweird.f32 %v337
      %vm344 = vmor %vm342, %vm343
      %v345 = vsel %vm344, %v337, %v341
      %v346 = vand.u32 2147483647, %v321
      %vm347 = vcmp.eq.f32.partialorder %v346, 8.507059e+37
      %v348 = vand.u32 %v321, 2147483648
      %v349 = vor.u32 1.1754944e-38, %v348
      %v350 = vsel %vm347, %v349, %v345
      %v351 = vmul.f32 1.0, %v350
      %v352 = vrcp.pop %v322
      %v353 = vmul.f32 %v322, %v352
      %v354 = vsub.f32 1.0, %v353
      %v355 = vmul.f32 %v352, %v354
      %v356 = vadd.f32 %v352, %v355
      %vm357 = vweird.f32 %v322
      %vm358 = vweird.f32 %v352
      %vm359 = vmor %vm357, %vm358
      %v360 = vsel %vm359, %v352, %v356
      %v361 = vand.u32 2147483647, %v322
      %vm362 = vcmp.eq.f32.partialorder %v361, 8.507059e+37
      %v363 = vand.u32 %v322, 2147483648
      %v364 = vor.u32 1.1754944e-38, %v363
      %v365 = vsel %vm362, %v364, %v360
      %v366 = vmul.f32 1.0, %v365
      %vm367 = vcmp.ge.f32.partialorder %v291, 0.0
      %vm368 = vcmp.ge.f32.partialorder %v311, 0.0
      %v369 = vmul.f32 %v318, %v351
      %v370 = vmul.f32 %v320, %v366
      %v371 = vsel %vm367, %v351, %v369
      %v372 = vsel %vm368, %v366, %v370
      %v375 = vrot.slane %v311, 7
      %vm376 = vcmask 1040384
      %v377 = vsel %vm376, %v291, %v375
      %v379 = vlaneseq
      %vm380 = vcmp.ge.s32.totalorder %v379, 0
      %vm381 = vcmp.lt.s32.totalorder %v379, 256
      %vm382 = vmand %vm380, %vm381
      %383 = vst.msk [vmem:[%s248] sm:$0x3] %vm382, %v377
      %v384 = vld [vmem:[%s244] sm:$0x3f]
      %v385 = vld [vmem:[%s244 + $0x8] sm:$0x3f]
      %v386 = vmul.f32 %v384, 10.0
      %v387 = vmul.f32 %v385, 10.0
      %v388 = vmul.f32 %v386, %v331
      %v389 = vmul.f32 %v387, %v332
      %v390 = vsub.f32 1.0, %v384
      %v391 = vsub.f32 1.0, %v385
      %v392 = vmul.f32 %v390, %v335
      %v393 = vmul.f32 %v391, %v336
      %v394 = vadd.f32 %v388, %v392
      %v395 = vadd.f32 %v389, %v393
      %v396 = vsel %vm376, %v394, 0.0
      %v397 = vsel %vm376, %v395, 0.0
      %v398 = vadd.f32 %v396, %v397
      %399 = vadd.xlane.f32.xlu0 %v398
      %v400 = vpop.xlane.xlu0 %399
      %v401 = vrot.slane %v400, 4
      %v402 = vadd.f32 %v400, %v401
      %v403 = vrot.slane %v402, 2
      %v404 = vadd.f32 %v402, %v403
      %v405 = vrot.slane %v404, 1
      %v406 = vadd.f32 %v404, %v405
      %s407 = vtos %v406
      %v408 = vmul.f32 %v371, %v384
      %v409 = vmul.f32 %v372, %v385
      %v410 = vsel %vm376, %v408, 0.0
      %v411 = vsel %vm376, %v409, 0.0
      %v412 = vadd.f32 %v410, %v411
      %413 = vadd.xlane.f32.xlu0 %v412
      %v414 = vpop.xlane.xlu0 %413
      %v415 = vrot.slane %v414, 4
      %v416 = vadd.f32 %v414, %v415
      %v417 = vrot.slane %v416, 2
      %v418 = vadd.f32 %v416, %v417
      %v419 = vrot.slane %v418, 1
      %v420 = vadd.f32 %v418, %v419
      %s421 = vtos %v420
      %v422 = vadd.f32 %v371, %v384
      %v423 = vadd.f32 %v372, %v385
      %v424 = vsel %vm376, %v422, 0.0
      %v425 = vsel %vm376, %v423, 0.0
      %v426 = vadd.f32 %v424, %v425
      %427 = vadd.xlane.f32.xlu0 %v426
      %v428 = vpop.xlane.xlu0 %427
      %v429 = vrot.slane %v428, 4
      %v430 = vadd.f32 %v428, %v429
      %v431 = vrot.slane %v430, 2
      %v432 = vadd.f32 %v430, %v431
      %v433 = vrot.slane %v432, 1
      %v434 = vadd.f32 %v432, %v433
      %s435 = vtos %v434
      %v438 = vrot.slane %v331, 1
      %v439 = vrot.slane %v332, 1
      %v442 = vmul.f32 %v386, %v438
      %v443 = vmul.f32 %v387, %v439
      %v446 = vrot.slane %v335, 1
      %v447 = vrot.slane %v336, 1
      %v450 = vmul.f32 %v390, %v446
      %v451 = vmul.f32 %v391, %v447
      %v452 = vadd.f32 %v442, %v450
      %v453 = vadd.f32 %v443, %v451
      %v456 = vrot.slane %v452, 4
      %v457 = vrot.slane %v453, 4
      %v460 = vsel %vm376, %v456, 0.0
      %v461 = vsel %vm376, %v457, 0.0
      %v462 = vadd.f32 %v460, %v461
      %463 = vadd.xlane.f32.xlu0 %v462
      %v464 = vpop.xlane.xlu0 %463
      %v465 = vrot.slane %v464, 4
      %v466 = vadd.f32 %v464, %v465
      %v467 = vrot.slane %v466, 2
      %v468 = vadd.f32 %v466, %v467
      %v469 = vrot.slane %v468, 1
      %v470 = vadd.f32 %v468, %v469
      %s471 = vtos %v470
      %v474 = vrot.slane %v384, 7
      %v475 = vrot.slane %v385, 7
      %v478 = vmul.f32 %v371, %v474
      %v479 = vmul.f32 %v372, %v475
      %v482 = vrot.slane %v478, 5
      %v483 = vrot.slane %v479, 5
      %v486 = vsel %vm376, %v482, 0.0
      %v487 = vsel %vm376, %v483, 0.0
      %v488 = vadd.f32 %v486, %v487
      %489 = vadd.xlane.f32.xlu0 %v488
      %v490 = vpop.xlane.xlu0 %489
      %v491 = vrot.slane %v490, 4
      %v492 = vadd.f32 %v490, %v491
      %v493 = vrot.slane %v492, 2
      %v494 = vadd.f32 %v492, %v493
      %v495 = vrot.slane %v494, 1
      %v496 = vadd.f32 %v494, %v495
      %s497 = vtos %v496
      %v498 = vadd.f32 %v371, %v474
      %v499 = vadd.f32 %v372, %v475
      %v502 = vrot.slane %v498, 5
      %v503 = vrot.slane %v499, 5
      %v506 = vsel %vm376, %v502, 0.0
      %v507 = vsel %vm376, %v503, 0.0
      %v508 = vadd.f32 %v506, %v507
      %509 = vadd.xlane.f32.xlu0 %v508
      %v510 = vpop.xlane.xlu0 %509
      %v511 = vrot.slane %v510, 4
      %v512 = vadd.f32 %v510, %v511
      %v513 = vrot.slane %v512, 2
      %v514 = vadd.f32 %v512, %v513
      %v515 = vrot.slane %v514, 1
      %v516 = vadd.f32 %v514, %v515
      %s517 = vtos %v516
      %v518 = vsub.f32 0.0, %v331
      %v519 = vsub.f32 0.0, %v332
      %v520 = vmax.f32 %v518, -100.0
      %v521 = vmax.f32 %v519, -100.0
      %v522 = vsub.f32 0.0, %v335
      %v523 = vsub.f32 0.0, %v336
      %v524 = vmax.f32 %v522, -100.0
      %v525 = vmax.f32 %v523, -100.0
      %vm526 = vcmp.gt.f32.partialorder %v384, 0.5
      %vm527 = vcmp.gt.f32.partialorder %v385, 0.5
      %v530 = vrot.slane %v520, 3
      %v531 = vrot.slane %v521, 3
      %v534 = vsel %vm526, %v530, -100.0
      %v535 = vsel %vm527, %v531, -100.0
      %v538 = vrot.slane %v524, 3
      %v539 = vrot.slane %v525, 3
      %v542 = vsel %vm526, %v538, 0.0
      %v543 = vsel %vm527, %v539, 0.0
      %v546 = vrot.slane %v534, 6
      %v547 = vrot.slane %v535, 6
      %v550 = vmul.f32 %v384, %v546
      %v551 = vmul.f32 %v385, %v547
      %v554 = vrot.slane %v542, 6
      %v555 = vrot.slane %v543, 6
      %v558 = vmul.f32 %v390, %v554
      %v559 = vmul.f32 %v391, %v555
      %v560 = vadd.f32 %v550, %v558
      %v561 = vadd.f32 %v551, %v559
      %v564 = vrot.slane %v560, 2
      %v565 = vrot.slane %v561, 2
      %v568 = vsel %vm376, %v564, 0.0
      %v569 = vsel %vm376, %v565, 0.0
      %v570 = vadd.f32 %v568, %v569
      %571 = vadd.xlane.f32.xlu0 %v570
      %v572 = vpop.xlane.xlu0 %571
      %v573 = vrot.slane %v572, 4
      %v574 = vadd.f32 %v572, %v573
      %v575 = vrot.slane %v574, 2
      %v576 = vadd.f32 %v574, %v575
      %v577 = vrot.slane %v576, 1
      %v578 = vadd.f32 %v576, %v577
      %s579 = vtos %v578
      %s580 = ssub.f32 0.0, %s579
      %v581 = vrot.slane %v291, 4
      %v582 = vrot.slane %v311, 4
      %v585 = vmul.f32 %v384, %v581
      %v586 = vmul.f32 %v385, %v582
      %v587 = vrot.slane %v384, 3
      %v588 = vrot.slane %v385, 3
      %v591 = vsub.f32 %v585, %v587
      %v592 = vsub.f32 %v586, %v588
      %v593 = vmul.f32 %v591, %v591
      %v594 = vmul.f32 %v592, %v592
      %v595 = vsel %vm376, %v593, 0.0
      %v596 = vsel %vm376, %v594, 0.0
      %v597 = vadd.f32 %v595, %v596
      %598 = vadd.xlane.f32.xlu0 %v597
      %v599 = vpop.xlane.xlu0 %598
      %v600 = vrot.slane %v599, 4
      %v601 = vadd.f32 %v599, %v600
      %v602 = vrot.slane %v601, 2
      %v603 = vadd.f32 %v601, %v602
      %v604 = vrot.slane %v603, 1
      %v605 = vadd.f32 %v603, %v604
      %s606 = vtos %v605
      %v607 = vlaneseq
      %v608 = vshrl.u32 %v607, 7
      %v609 = vadd.s32 %v608, 1
      %v610 = vcvt.s32.f32 %v609
      %v611 = vperm.slane %v384, 1
      %v612 = vperm.slane %v385, 1
      %vm613 = vcmp.eq.f32.partialorder %v611, %v610
      %vm614 = vcmp.eq.f32.partialorder %v612, %v610
      %v615 = vsel %vm613, 1, 0
      %v616 = vsel %vm614, 1, 0
      %v617 = vcvt.s32.f32 %v615
      %v618 = vcvt.s32.f32 %v616
      %vm619 = vcmask 1044480
      %v620 = vsel %vm619, %v617, 0.0
      %v621 = vsel %vm619, %v618, 0.0
      %v622 = vadd.f32 %v620, %v621
      %623 = vadd.xlane.f32.xlu0 %v622
      %v624 = vpop.xlane.xlu0 %623
      %v625 = vmax.f32 %v624, 1.0
      %vm626 = vcmp.le.f32.partialorder %v624, 0.0
      %v627 = vsel %vm626, 1, 0
      %v628 = vcvt.s32.f32 %v627
      %v629 = vrot.slane %v291, 1
      %v630 = vrot.slane %v311, 1
      %633 = vmatpush.xpose.msra.mxu0 0.0
      %634 = vmatpush.xpose.msra.mxu0 0.0
      %635 = vmatpush.xpose.msra.mxu0 0.0
      %636 = vmatpush.xpose.msra.mxu0 0.0
      %637 = vmatpush.xpose.msra.mxu0 0.0
      %638 = vmatpush.xpose.msra.mxu0 0.0
      %639 = vmatpush.xpose.msra.mxu0 0.0
      %640 = vmatpush.xpose.msra.mxu0 0.0
      %641 = vmatpush.xpose.msra.mxu0 0.0
      %642 = vmatpush.xpose.msra.mxu0 0.0
      %643 = vmatpush.xpose.msra.mxu0 0.0
      %644 = vmatpush.xpose.msra.mxu0 0.0
      %645 = vmatpush.xpose.msra.mxu0 0.0
      %646 = vmatpush.xpose.msra.mxu0 0.0
      %647 = vmatpush.xpose.msra.mxu0 0.0
      %648 = vmatpush.xpose.msra.mxu0 %v629
      %649 = vmatmul.f32.gmra.mxu0 %v617
      %v650 = vpop.f32.mrf.mxu0
      %v651 = vadd.f32 0.0, %v650
      %652 = vdwg.mxu0
      %653 = vmatpush.xpose.msra.mxu0 0.0
      %654 = vmatpush.xpose.msra.mxu0 0.0
      %655 = vmatpush.xpose.msra.mxu0 0.0
      %656 = vmatpush.xpose.msra.mxu0 0.0
      %657 = vmatpush.xpose.msra.mxu0 0.0
      %658 = vmatpush.xpose.msra.mxu0 0.0
      %659 = vmatpush.xpose.msra.mxu0 0.0
      %660 = vmatpush.xpose.msra.mxu0 0.0
      %661 = vmatpush.xpose.msra.mxu0 0.0
      %662 = vmatpush.xpose.msra.mxu0 0.0
      %663 = vmatpush.xpose.msra.mxu0 0.0
      %664 = vmatpush.xpose.msra.mxu0 0.0
      %665 = vmatpush.xpose.msra.mxu0 0.0
      %666 = vmatpush.xpose.msra.mxu0 0.0
      %667 = vmatpush.xpose.msra.mxu0 0.0
      %668 = vmatpush.xpose.msra.mxu0 %v630
      %669 = vmatmul.f32.gmra.mxu0 %v618
      %v670 = vpop.f32.mrf.mxu0
      %v671 = vadd.f32 %v651, %v670
      %672 = vdwg.mxu0
      %v673 = vrcp.pop %v625
      %v674 = vmul.f32 %v625, %v673
      %v675 = vsub.f32 1.0, %v674
      %v676 = vmul.f32 %v673, %v675
      %v677 = vadd.f32 %v673, %v676
      %vm678 = vweird.f32 %v625
      %vm679 = vweird.f32 %v673
      %vm680 = vmor %vm678, %vm679
      %v681 = vsel %vm680, %v673, %v677
      %v682 = vand.u32 2147483647, %v625
      %vm683 = vcmp.eq.f32.partialorder %v682, 8.507059e+37
      %v684 = vand.u32 %v625, 2147483648
      %v685 = vor.u32 1.1754944e-38, %v684
      %v686 = vsel %vm683, %v685, %v681
      %v687 = vmul.f32 %v671, %v686
      %v688 = vmul.f32 %v291, %v291
      %v689 = vmul.f32 %v311, %v311
      %v692 = vrot.slane %v688, 1
      %v693 = vrot.slane %v689, 1
      %vm696 = vcmask 1041408
      %v697 = vsel %vm696, %v692, 0.0
      %v698 = vrot.slane %v697, 4
      %v699 = vadd.f32 %v697, %v698
      %v700 = vrot.slane %v699, 2
      %v701 = vadd.f32 %v699, %v700
      %v702 = vrot.slane %v701, 1
      %v703 = vadd.f32 %v701, %v702
      %v704 = vsel %vm696, %v693, 0.0
      %v705 = vrot.slane %v704, 4
      %v706 = vadd.f32 %v704, %v705
      %v707 = vrot.slane %v706, 2
      %v708 = vadd.f32 %v706, %v707
      %v709 = vrot.slane %v708, 1
      %v710 = vadd.f32 %v708, %v709
      %v711 = vmul.f32 %v687, %v687
      %vm712 = vcmask 12288
      %v713 = vsel %vm712, %v711, 0.0
      %714 = vadd.xlane.f32.xlu0 %v713
      %v715 = vpop.xlane.xlu0 %714
      %vm716 = vcmask 15360
      %v718 = vsel %vm716, %v687, 0
      %v720 = vsel %vm696, %v629, 0
      %v722 = vsel %vm696, %v630, 0
      %724 = vmatpush.msra.mxu0 0.0
      %725 = vmatpush.msra.mxu0 0.0
      %726 = vmatpush.msra.mxu0 0.0
      %727 = vmatpush.msra.mxu0 0.0
      %728 = vmatpush.msra.mxu0 0.0
      %729 = vmatpush.msra.mxu0 0.0
      %730 = vmatpush.msra.mxu0 0.0
      %731 = vmatpush.msra.mxu0 0.0
      %732 = vmatpush.msra.mxu0 0.0
      %733 = vmatpush.msra.mxu0 0.0
      %734 = vmatpush.msra.mxu0 0.0
      %735 = vmatpush.msra.mxu0 0.0
      %736 = vmatpush.msra.mxu0 0.0
      %737 = vmatpush.msra.mxu0 0.0
      %738 = vmatpush.msra.mxu0 0.0
      %739 = vmatpush.msra.mxu0 %v720
      %740 = vmatmul.f32.gmra.mxu0 %v718
      %v741 = vpop.f32.mrf.mxu0
      %v742 = vadd.f32 0.0, %v741
      %743 = vdwg.mxu0
      %744 = vmatpush.msra.mxu0 0.0
      %745 = vmatpush.msra.mxu0 0.0
      %746 = vmatpush.msra.mxu0 0.0
      %747 = vmatpush.msra.mxu0 0.0
      %748 = vmatpush.msra.mxu0 0.0
      %749 = vmatpush.msra.mxu0 0.0
      %750 = vmatpush.msra.mxu0 0.0
      %751 = vmatpush.msra.mxu0 0.0
      %752 = vmatpush.msra.mxu0 0.0
      %753 = vmatpush.msra.mxu0 0.0
      %754 = vmatpush.msra.mxu0 0.0
      %755 = vmatpush.msra.mxu0 0.0
      %756 = vmatpush.msra.mxu0 0.0
      %757 = vmatpush.msra.mxu0 0.0
      %758 = vmatpush.msra.mxu0 0.0
      %759 = vmatpush.msra.mxu0 %v722
      %760 = vmatmul.f32.gmra.mxu0 %v718
      %v761 = vpop.f32.mrf.mxu0
      %v762 = vadd.f32 0.0, %v761
      %763 = vdwg.mxu0
      %v764 = vmul.f32 %v742, 2.0
      %v765 = vmul.f32 %v762, 2.0
      %v766 = vsub.f32 %v703, %v764
      %v767 = vsub.f32 %v710, %v765
      %v768 = vadd.f32 %v766, %v715
      %v769 = vadd.f32 %v767, %v715
      %v770 = vmax.f32 %v768, 0.0
      %v771 = vmax.f32 %v769, 0.0
      %v772 = vrsqrt.pop %v770
      %v773 = vmul.f32 %v772, %v770
      %v774 = vmul.f32 %v773, %v772
      %v775 = vmul.f32 0.5, %v774
      %v776 = vsub.f32 1.5, %v775
      %v777 = vmul.f32 %v772, %v776
      %v778 = vmul.f32 %v770, %v777
      %vm779 = vcmp.eq.f32.partialorder %v770, inf
      %v780 = vsel %vm779, %v770, %v778
      %vm781 = vcmp.eq.f32.partialorder %v770, 0.0
      %v782 = vand.u32 %v770, 2147483648
      %v783 = vsel %vm781, %v782, %v780
      %v784 = vrsqrt.pop %v771
      %v785 = vmul.f32 %v784, %v771
      %v786 = vmul.f32 %v785, %v784
      %v787 = vmul.f32 0.5, %v786
      %v788 = vsub.f32 1.5, %v787
      %v789 = vmul.f32 %v784, %v788
      %v790 = vmul.f32 %v771, %v789
      %vm791 = vcmp.eq.f32.partialorder %v771, inf
      %v792 = vsel %vm791, %v771, %v790
      %vm793 = vcmp.eq.f32.partialorder %v771, 0.0
      %v794 = vand.u32 %v771, 2147483648
      %v795 = vsel %vm793, %v794, %v792
      %v796 = vsub.f32 %v783, 1.0
      %v797 = vsub.f32 %v795, 1.0
      %v798 = vmax.f32 %v796, 0.0
      %v799 = vmax.f32 %v797, 0.0
      %v800 = vmul.f32 %v798, %v617
      %v801 = vmul.f32 %v799, %v618
      %v802 = vsel %vm619, %v800, 0.0
      %v803 = vsel %vm619, %v801, 0.0
      %v804 = vadd.f32 %v802, %v803
      %805 = vadd.xlane.f32.xlu0 %v804
      %v806 = vpop.xlane.xlu0 %805
      %v807 = vmul.f32 %v806, %v686
      %vm808 = vcmask 4096
      %v809 = vsel %vm808, %v807, 0.0
      %810 = vadd.xlane.f32.xlu0 %v809
      %v811 = vpop.xlane.xlu0 %810
      %v812 = vrot.slane %v811, 4
      %v813 = vadd.f32 %v811, %v812
      %v814 = vrot.slane %v813, 2
      %v815 = vadd.f32 %v813, %v814
      %v816 = vrot.slane %v815, 1
      %v817 = vadd.f32 %v815, %v816
      %s818 = vtos %v817
      %v819 = vmul.f32 %v628, 10000.0
      %v820 = vmul.f32 %v819, %v610
      %v821 = vadd.f32 %v687, %v820
      %v823 = vsel %vm716, %v821, 0
      %825 = vmatpush.xpose.msra.mxu0 0.0
      %826 = vmatpush.xpose.msra.mxu0 0.0
      %827 = vmatpush.xpose.msra.mxu0 0.0
      %828 = vmatpush.xpose.msra.mxu0 0.0
      %829 = vmatpush.xpose.msra.mxu0 0.0
      %830 = vmatpush.xpose.msra.mxu0 0.0
      %831 = vmatpush.xpose.msra.mxu0 0.0
      %832 = vmatpush.xpose.msra.mxu0 0.0
      %833 = vmatpush.xpose.msra.mxu0 0.0
      %834 = vmatpush.xpose.msra.mxu0 0.0
      %835 = vmatpush.xpose.msra.mxu0 0.0
      %836 = vmatpush.xpose.msra.mxu0 0.0
      %837 = vmatpush.xpose.msra.mxu0 0.0
      %838 = vmatpush.xpose.msra.mxu0 0.0
      %839 = vmatpush.xpose.msra.mxu0 0.0
      %840 = vmatpush.xpose.msra.mxu0 %v823
      %841 = vmatmul.f32.gmra.mxu0 %v823
      %v842 = vpop.f32.mrf.mxu0
      %v843 = vadd.f32 0.0, %v842
      %844 = vdwg.mxu0
      %v845 = vlaneseq
      %v846 = vand.u32 %v845, 127
      %vm847 = vcmp.eq.s32.totalorder %v608, %v846
      %v848 = vsel %vm847, 1, 0
      %v849 = vcvt.s32.f32 %v848
      %v850 = vmul.f32 %v843, %v849
      %vm851 = vcmask 36864
      %v852 = vsel %vm851, %v850, 0.0
      %853 = vadd.xlane.f32.xlu0 %v852
      %v854 = vpop.xlane.xlu0 %853
      %v855 = vrot.slane %v852, 4
      %v856 = vadd.f32 %v852, %v855
      %v857 = vrot.slane %v856, 2
      %v858 = vadd.f32 %v856, %v857
      %v859 = vrot.slane %v858, 1
      %v860 = vadd.f32 %v858, %v859
      %v861 = vadd.f32 %v854, %v860
      %v862 = vmul.f32 %v843, 2.0
      %v863 = vsub.f32 %v861, %v862
      %v864 = vmax.f32 %v863, 0.0
      %v865 = vrsqrt.pop %v864
      %v866 = vmul.f32 %v865, %v864
      %v867 = vmul.f32 %v866, %v865
      %v868 = vmul.f32 0.5, %v867
      %v869 = vsub.f32 1.5, %v868
      %v870 = vmul.f32 %v865, %v869
      %v871 = vmul.f32 %v864, %v870
      %vm872 = vcmp.eq.f32.partialorder %v864, inf
      %v873 = vsel %vm872, %v864, %v871
      %vm874 = vcmp.eq.f32.partialorder %v864, 0.0
      %v875 = vand.u32 %v864, 2147483648
      %v876 = vsel %vm874, %v875, %v873
      %v877 = vsub.f32 1.0, %v849
      %v878 = vsub.f32 5.0, %v876
      %v879 = vmax.f32 %v878, 0.0
      %v880 = vmul.f32 %v877, %v879
      %v881 = vsel %vm851, %v880, 0.0
      %882 = vadd.xlane.f32.xlu0 %v881
      %v883 = vpop.xlane.xlu0 %882
      %v884 = vrot.slane %v883, 4
      %v885 = vadd.f32 %v883, %v884
      %v886 = vrot.slane %v885, 2
      %v887 = vadd.f32 %v885, %v886
      %v888 = vrot.slane %v887, 1
      %v889 = vadd.f32 %v887, %v888
      %s890 = vtos %v889
      %s891 = sadd.f32 %s818, %s890
      %v892 = vperm.slane %v384, 5
      %v893 = vperm.slane %v385, 5
      %vm894 = vcmp.eq.f32.partialorder %v892, %v610
      %vm895 = vcmp.eq.f32.partialorder %v893, %v610
      %v896 = vsel %vm894, 1, 0
      %v897 = vsel %vm895, 1, 0
      %v898 = vcvt.s32.f32 %v896
      %v899 = vcvt.s32.f32 %v897
      %v900 = vsel %vm619, %v898, 0.0
      %v901 = vsel %vm619, %v899, 0.0
      %v902 = vadd.f32 %v900, %v901
      %903 = vadd.xlane.f32.xlu0 %v902
      %v904 = vpop.xlane.xlu0 %903
      %v905 = vmax.f32 %v904, 1.0
      %vm906 = vcmp.le.f32.partialorder %v904, 0.0
      %v907 = vsel %vm906, 1, 0
      %v908 = vcvt.s32.f32 %v907
      %v909 = vrot.slane %v291, 6
      %v910 = vrot.slane %v311, 6
      %913 = vmatpush.xpose.msra.mxu0 0.0
      %914 = vmatpush.xpose.msra.mxu0 0.0
      %915 = vmatpush.xpose.msra.mxu0 0.0
      %916 = vmatpush.xpose.msra.mxu0 0.0
      %917 = vmatpush.xpose.msra.mxu0 0.0
      %918 = vmatpush.xpose.msra.mxu0 0.0
      %919 = vmatpush.xpose.msra.mxu0 0.0
      %920 = vmatpush.xpose.msra.mxu0 0.0
      %921 = vmatpush.xpose.msra.mxu0 0.0
      %922 = vmatpush.xpose.msra.mxu0 0.0
      %923 = vmatpush.xpose.msra.mxu0 0.0
      %924 = vmatpush.xpose.msra.mxu0 0.0
      %925 = vmatpush.xpose.msra.mxu0 0.0
      %926 = vmatpush.xpose.msra.mxu0 0.0
      %927 = vmatpush.xpose.msra.mxu0 0.0
      %928 = vmatpush.xpose.msra.mxu0 %v909
      %929 = vmatmul.f32.gmra.mxu0 %v898
      %v930 = vpop.f32.mrf.mxu0
      %v931 = vadd.f32 0.0, %v930
      %932 = vdwg.mxu0
      %933 = vmatpush.xpose.msra.mxu0 0.0
      %934 = vmatpush.xpose.msra.mxu0 0.0
      %935 = vmatpush.xpose.msra.mxu0 0.0
      %936 = vmatpush.xpose.msra.mxu0 0.0
      %937 = vmatpush.xpose.msra.mxu0 0.0
      %938 = vmatpush.xpose.msra.mxu0 0.0
      %939 = vmatpush.xpose.msra.mxu0 0.0
      %940 = vmatpush.xpose.msra.mxu0 0.0
      %941 = vmatpush.xpose.msra.mxu0 0.0
      %942 = vmatpush.xpose.msra.mxu0 0.0
      %943 = vmatpush.xpose.msra.mxu0 0.0
      %944 = vmatpush.xpose.msra.mxu0 0.0
      %945 = vmatpush.xpose.msra.mxu0 0.0
      %946 = vmatpush.xpose.msra.mxu0 0.0
      %947 = vmatpush.xpose.msra.mxu0 0.0
      %948 = vmatpush.xpose.msra.mxu0 %v910
      %949 = vmatmul.f32.gmra.mxu0 %v899
      %v950 = vpop.f32.mrf.mxu0
      %v951 = vadd.f32 %v931, %v950
      %952 = vdwg.mxu0
      %v953 = vrcp.pop %v905
      %v954 = vmul.f32 %v905, %v953
      %v955 = vsub.f32 1.0, %v954
      %v956 = vmul.f32 %v953, %v955
      %v957 = vadd.f32 %v953, %v956
      %vm958 = vweird.f32 %v905
      %vm959 = vweird.f32 %v953
      %vm960 = vmor %vm958, %vm959
      %v961 = vsel %vm960, %v953, %v957
      %v962 = vand.u32 2147483647, %v905
      %vm963 = vcmp.eq.f32.partialorder %v962, 8.507059e+37
      %v964 = vand.u32 %v905, 2147483648
      %v965 = vor.u32 1.1754944e-38, %v964
      %v966 = vsel %vm963, %v965, %v961
      %v967 = vmul.f32 %v951, %v966
      %v968 = vrot.slane %v688, 6
      %v969 = vrot.slane %v689, 6
      %v972 = vsel %vm696, %v968, 0.0
      %v973 = vrot.slane %v972, 4
      %v974 = vadd.f32 %v972, %v973
      %v975 = vrot.slane %v974, 2
      %v976 = vadd.f32 %v974, %v975
      %v977 = vrot.slane %v976, 1
      %v978 = vadd.f32 %v976, %v977
      %v979 = vsel %vm696, %v969, 0.0
      %v980 = vrot.slane %v979, 4
      %v981 = vadd.f32 %v979, %v980
      %v982 = vrot.slane %v981, 2
      %v983 = vadd.f32 %v981, %v982
      %v984 = vrot.slane %v983, 1
      %v985 = vadd.f32 %v983, %v984
      %v986 = vmul.f32 %v967, %v967
      %v987 = vsel %vm712, %v986, 0.0
      %988 = vadd.xlane.f32.xlu0 %v987
      %v989 = vpop.xlane.xlu0 %988
      %v991 = vsel %vm716, %v967, 0
      %v993 = vsel %vm696, %v909, 0
      %v995 = vsel %vm696, %v910, 0
      %997 = vmatpush.msra.mxu0 0.0
      %998 = vmatpush.msra.mxu0 0.0
      %999 = vmatpush.msra.mxu0 0.0
      %1000 = vmatpush.msra.mxu0 0.0
      %1001 = vmatpush.msra.mxu0 0.0
      %1002 = vmatpush.msra.mxu0 0.0
      %1003 = vmatpush.msra.mxu0 0.0
      %1004 = vmatpush.msra.mxu0 0.0
      %1005 = vmatpush.msra.mxu0 0.0
      %1006 = vmatpush.msra.mxu0 0.0
      %1007 = vmatpush.msra.mxu0 0.0
      %1008 = vmatpush.msra.mxu0 0.0
      %1009 = vmatpush.msra.mxu0 0.0
      %1010 = vmatpush.msra.mxu0 0.0
      %1011 = vmatpush.msra.mxu0 0.0
      %1012 = vmatpush.msra.mxu0 %v993
      %1013 = vmatmul.f32.gmra.mxu0 %v991
      %v1014 = vpop.f32.mrf.mxu0
      %v1015 = vadd.f32 0.0, %v1014
      %1016 = vdwg.mxu0
      %1017 = vmatpush.msra.mxu0 0.0
      %1018 = vmatpush.msra.mxu0 0.0
      %1019 = vmatpush.msra.mxu0 0.0
      %1020 = vmatpush.msra.mxu0 0.0
      %1021 = vmatpush.msra.mxu0 0.0
      %1022 = vmatpush.msra.mxu0 0.0
      %1023 = vmatpush.msra.mxu0 0.0
      %1024 = vmatpush.msra.mxu0 0.0
      %1025 = vmatpush.msra.mxu0 0.0
      %1026 = vmatpush.msra.mxu0 0.0
      %1027 = vmatpush.msra.mxu0 0.0
      %1028 = vmatpush.msra.mxu0 0.0
      %1029 = vmatpush.msra.mxu0 0.0
      %1030 = vmatpush.msra.mxu0 0.0
      %1031 = vmatpush.msra.mxu0 0.0
      %1032 = vmatpush.msra.mxu0 %v995
      %1033 = vmatmul.f32.gmra.mxu0 %v991
      %v1034 = vpop.f32.mrf.mxu0
      %v1035 = vadd.f32 0.0, %v1034
      %1036 = vdwg.mxu0
      %v1037 = vmul.f32 %v1015, 2.0
      %v1038 = vmul.f32 %v1035, 2.0
      %v1039 = vsub.f32 %v978, %v1037
      %v1040 = vsub.f32 %v985, %v1038
      %v1041 = vadd.f32 %v1039, %v989
      %v1042 = vadd.f32 %v1040, %v989
      %v1043 = vmax.f32 %v1041, 0.0
      %v1044 = vmax.f32 %v1042, 0.0
      %v1045 = vrsqrt.pop %v1043
      %v1046 = vmul.f32 %v1045, %v1043
      %v1047 = vmul.f32 %v1046, %v1045
      %v1048 = vmul.f32 0.5, %v1047
      %v1049 = vsub.f32 1.5, %v1048
      %v1050 = vmul.f32 %v1045, %v1049
      %v1051 = vmul.f32 %v1043, %v1050
      %vm1052 = vcmp.eq.f32.partialorder %v1043, inf
      %v1053 = vsel %vm1052, %v1043, %v1051
      %vm1054 = vcmp.eq.f32.partialorder %v1043, 0.0
      %v1055 = vand.u32 %v1043, 2147483648
      %v1056 = vsel %vm1054, %v1055, %v1053
      %v1057 = vrsqrt.pop %v1044
      %v1058 = vmul.f32 %v1057, %v1044
      %v1059 = vmul.f32 %v1058, %v1057
      %v1060 = vmul.f32 0.5, %v1059
      %v1061 = vsub.f32 1.5, %v1060
      %v1062 = vmul.f32 %v1057, %v1061
      %v1063 = vmul.f32 %v1044, %v1062
      %vm1064 = vcmp.eq.f32.partialorder %v1044, inf
      %v1065 = vsel %vm1064, %v1044, %v1063
      %vm1066 = vcmp.eq.f32.partialorder %v1044, 0.0
      %v1067 = vand.u32 %v1044, 2147483648
      %v1068 = vsel %vm1066, %v1067, %v1065
      %v1069 = vsub.f32 %v1056, 1.0
      %v1070 = vsub.f32 %v1068, 1.0
      %v1071 = vmax.f32 %v1069, 0.0
      %v1072 = vmax.f32 %v1070, 0.0
      %v1073 = vmul.f32 %v1071, %v898
      %v1074 = vmul.f32 %v1072, %v899
      %v1075 = vsel %vm619, %v1073, 0.0
      %v1076 = vsel %vm619, %v1074, 0.0
      %v1077 = vadd.f32 %v1075, %v1076
      %1078 = vadd.xlane.f32.xlu0 %v1077
      %v1079 = vpop.xlane.xlu0 %1078
      %v1080 = vmul.f32 %v1079, %v966
      %v1081 = vsel %vm808, %v1080, 0.0
      %1082 = vadd.xlane.f32.xlu0 %v1081
      %v1083 = vpop.xlane.xlu0 %1082
      %v1084 = vrot.slane %v1083, 4
      %v1085 = vadd.f32 %v1083, %v1084
      %v1086 = vrot.slane %v1085, 2
      %v1087 = vadd.f32 %v1085, %v1086
      %v1088 = vrot.slane %v1087, 1
      %v1089 = vadd.f32 %v1087, %v1088
      %s1090 = vtos %v1089
      %v1091 = vmul.f32 %v908, 10000.0
      %v1092 = vmul.f32 %v1091, %v610
      %v1093 = vadd.f32 %v967, %v1092
      %v1095 = vsel %vm716, %v1093, 0
      %1097 = vmatpush.xpose.msra.mxu0 0.0
      %1098 = vmatpush.xpose.msra.mxu0 0.0
      %1099 = vmatpush.xpose.msra.mxu0 0.0
      %1100 = vmatpush.xpose.msra.mxu0 0.0
      %1101 = vmatpush.xpose.msra.mxu0 0.0
      %1102 = vmatpush.xpose.msra.mxu0 0.0
      %1103 = vmatpush.xpose.msra.mxu0 0.0
      %1104 = vmatpush.xpose.msra.mxu0 0.0
      %1105 = vmatpush.xpose.msra.mxu0 0.0
      %1106 = vmatpush.xpose.msra.mxu0 0.0
      %1107 = vmatpush.xpose.msra.mxu0 0.0
      %1108 = vmatpush.xpose.msra.mxu0 0.0
      %1109 = vmatpush.xpose.msra.mxu0 0.0
      %1110 = vmatpush.xpose.msra.mxu0 0.0
      %1111 = vmatpush.xpose.msra.mxu0 0.0
      %1112 = vmatpush.xpose.msra.mxu0 %v1095
      %1113 = vmatmul.f32.gmra.mxu0 %v1095
      %v1114 = vpop.f32.mrf.mxu0
      %v1115 = vadd.f32 0.0, %v1114
      %1116 = vdwg.mxu0
      %v1117 = vmul.f32 %v1115, %v849
      %v1118 = vsel %vm851, %v1117, 0.0
      %1119 = vadd.xlane.f32.xlu0 %v1118
      %v1120 = vpop.xlane.xlu0 %1119
      %v1121 = vrot.slane %v1118, 4
      %v1122 = vadd.f32 %v1118, %v1121
      %v1123 = vrot.slane %v1122, 2
      %v1124 = vadd.f32 %v1122, %v1123
      %v1125 = vrot.slane %v1124, 1
      %v1126 = vadd.f32 %v1124, %v1125
      %v1127 = vadd.f32 %v1120, %v1126
      %v1128 = vmul.f32 %v1115, 2.0
      %v1129 = vsub.f32 %v1127, %v1128
      %v1130 = vmax.f32 %v1129, 0.0
      %v1131 = vrsqrt.pop %v1130
      %v1132 = vmul.f32 %v1131, %v1130
      %v1133 = vmul.f32 %v1132, %v1131
      %v1134 = vmul.f32 0.5, %v1133
      %v1135 = vsub.f32 1.5, %v1134
      %v1136 = vmul.f32 %v1131, %v1135
      %v1137 = vmul.f32 %v1130, %v1136
      %vm1138 = vcmp.eq.f32.partialorder %v1130, inf
      %v1139 = vsel %vm1138, %v1130, %v1137
      %vm1140 = vcmp.eq.f32.partialorder %v1130, 0.0
      %v1141 = vand.u32 %v1130, 2147483648
      %v1142 = vsel %vm1140, %v1141, %v1139
      %v1143 = vsub.f32 5.0, %v1142
      %v1144 = vmax.f32 %v1143, 0.0
      %v1145 = vmul.f32 %v877, %v1144
      %v1146 = vsel %vm851, %v1145, 0.0
      %1147 = vadd.xlane.f32.xlu0 %v1146
      %v1148 = vpop.xlane.xlu0 %1147
      %v1149 = vrot.slane %v1148, 4
      %v1150 = vadd.f32 %v1148, %v1149
      %v1151 = vrot.slane %v1150, 2
      %v1152 = vadd.f32 %v1150, %v1151
      %v1153 = vrot.slane %v1152, 1
      %v1154 = vadd.f32 %v1152, %v1153
      %s1155 = vtos %v1154
      %s1156 = sadd.f32 %s1090, %s1155
      %vm1157 = vcmp.eq.s32.totalorder %v846, 0
      %v1158 = vsel %vm1157, 1, 0
      %v1159 = vcvt.s32.f32 %v1158
      %v1160 = vstv %s407
      %v1161 = vmul.f32 %v1159, %v1160
      %vm1162 = vcmp.eq.s32.totalorder %v846, 1
      %v1163 = vsel %vm1162, 1, 0
      %v1164 = vcvt.s32.f32 %v1163
      %v1165 = vstv %s421
      %v1166 = vmul.f32 %v1164, %v1165
      %vm1167 = vcmp.eq.s32.totalorder %v846, 2
      %v1168 = vsel %vm1167, 1, 0
      %v1169 = vcvt.s32.f32 %v1168
      %v1170 = vstv %s435
      %v1171 = vmul.f32 %v1169, %v1170
      %vm1172 = vcmp.eq.s32.totalorder %v846, 3
      %v1173 = vsel %vm1172, 1, 0
      %v1174 = vcvt.s32.f32 %v1173
      %v1175 = vstv %s580
      %v1176 = vmul.f32 %v1174, %v1175
      %vm1177 = vcmp.eq.s32.totalorder %v846, 4
      %v1178 = vsel %vm1177, 1, 0
      %v1179 = vcvt.s32.f32 %v1178
      %v1180 = vstv %s606
      %v1181 = vmul.f32 %v1179, %v1180
      %vm1182 = vcmp.eq.s32.totalorder %v846, 5
      %v1183 = vsel %vm1182, 1, 0
      %v1184 = vcvt.s32.f32 %v1183
      %v1185 = vstv %s891
      %v1186 = vmul.f32 %v1184, %v1185
      %vm1187 = vcmp.eq.s32.totalorder %v846, 6
      %v1188 = vsel %vm1187, 1, 0
      %v1189 = vcvt.s32.f32 %v1188
      %v1190 = vstv %s471
      %v1191 = vmul.f32 %v1189, %v1190
      %vm1192 = vcmp.eq.s32.totalorder %v846, 7
      %v1193 = vsel %vm1192, 1, 0
      %v1194 = vcvt.s32.f32 %v1193
      %v1195 = vstv %s497
      %v1196 = vmul.f32 %v1194, %v1195
      %vm1197 = vcmp.eq.s32.totalorder %v846, 8
      %v1198 = vsel %vm1197, 1, 0
      %v1199 = vcvt.s32.f32 %v1198
      %v1200 = vstv %s517
      %v1201 = vmul.f32 %v1199, %v1200
      %vm1202 = vcmp.eq.s32.totalorder %v846, 9
      %v1203 = vsel %vm1202, 1, 0
      %v1204 = vcvt.s32.f32 %v1203
      %v1205 = vstv %s1156
      %v1206 = vmul.f32 %v1204, %v1205
      %v1207 = vadd.f32 %v1161, %v1166
      %v1208 = vadd.f32 %v1171, %v1176
      %v1209 = vadd.f32 %v1181, %v1186
      %v1210 = vadd.f32 %v1191, %v1196
      %v1211 = vadd.f32 %v1201, %v1206
      %v1212 = vadd.f32 %v1207, %v1208
      %v1213 = vadd.f32 %v1209, %v1210
      %v1214 = vadd.f32 %v1212, %v1213
      %v1215 = vadd.f32 %v1214, %v1211
      %1216 = vst [vmem:[%s251] sm:$0x1] %v1215
      %p1217 = scmp.lt.s32.totalorder %s17, 1
      %s1218 = scalar_select %p1217, %s17, 1
      %s1219 = smul.addr %s1218, 2
      %s1220 = scalar_lea.vmem %s4, %s1219
      %p1221 = scmp.lt.s32.totalorder %s17, 1
      %s1222 = scalar_select %p1221, %s17, 1
      %s1223 = scalar_lea.vmem %s5, %s1222
      // Predicated region
      $region37: #{combine_forward.1} parent=35 // pred_check
        %p1224 = pneg %p129
      $region38: #{combine_forward.1} parent=35 // pred_check_branch
        %1226 = sbr.rel (%p1224) target = $region40
      $region39: #{combine_forward.1} parent=35 // pred_region
        _
      $region40: #{combine_forward.1} parent=35 // pred_fallthru
        _
      // Predicated region
      $region41: #{combine_forward.1} parent=35 // pred_check
        %p1227 = pneg %p155
      $region42: #{combine_forward.1} parent=35 // pred_check_branch
        %1229 = sbr.rel (%p1227) target = $region44
      $region43: #{combine_forward.1} parent=35 // pred_region
        _
      $region44: #{combine_forward.1} parent=35 // pred_fallthru
        _
    $region36: #{combine_forward.1} parent=5 // pred_fallthru
      _
    %p1230 = scmp.le.s32.totalorder 2, %s12
    // Predicated region
    $region45: #{combine_forward.1} parent=5 // pred_check
      %p1231 = pneg %p1230
    $region46: #{combine_forward.1} parent=5 // pred_check_branch
      %1233 = sbr.rel (%p1231) target = $region48
    $region47: #{combine_forward.1} parent=5 // pred_region
      %s1234 = ssub.s32 %s12, 2
      // Predicated region
      $region49: #{combine_forward.1} parent=47 // pred_check
        %p1235 = pneg %p135
      $region50: #{combine_forward.1} parent=47 // pred_check_branch
        %1237 = sbr.rel (%p1235) target = $region52
      $region51: #{combine_forward.1} parent=47 // pred_region
        %p1238 = scmp.lt.s32.totalorder %s18, 1
        %s1239 = scalar_select %p1238, %s18, 1
        %s1240 = smul.addr %s1239, 2
        %s1241 = scalar_lea.vmem %s4, %s1240
      $region52: #{combine_forward.1} parent=47 // pred_fallthru
        _
      // Predicated region
      $region53: #{combine_forward.1} parent=47 // pred_check
        %p1242 = pneg %p161
      $region54: #{combine_forward.1} parent=47 // pred_check_branch
        %1244 = sbr.rel (%p1242) target = $region56
      $region55: #{combine_forward.1} parent=47 // pred_region
        %p1245 = scmp.lt.s32.totalorder %s18, 1
        %s1246 = scalar_select %p1245, %s18, 1
        %s1247 = scalar_lea.vmem %s5, %s1246
      $region56: #{combine_forward.1} parent=47 // pred_fallthru
        _
    $region48: #{combine_forward.1} parent=5 // pred_fallthru
      _
  $region6: #{combine_forward.1} parent=0 // loop_footer
    %s16 = sadd.s32 1, %s12
  $region7: #{combine_forward.1} parent=0 // loop_footer_branch
    %11 = sbr.rel target = $region3
  $region8: #{combine_forward.1} parent=0 // loop_exit
    _

</llo_original>
